<compile_context>
chip_gen: v7x
topology: tpu7x:2x2x1
jax: 0.10.0
libtpu: 0.0.40
codegen_flags: <defaults>
</compile_context>

<pallas_src>
import functools

import jax
import jax.numpy as jnp
from jax.experimental import pallas as pl
from jax.experimental.pallas import tpu as pltpu

# ----------------------- small config consistent with BertGGCN.__init__ -------
B           = 2      # graphs per batch
N_NODES     = 8      # nodes per graph (== conv1d_1 in_channels, Devign-style)
EMB_SIZE    = 16     # raw node feature dim (data.x)
GGNN_OUT    = 32     # gated_graph_conv_args['out_channels']
GGNN_LAYERS = 3      # gated_graph_conv_args['num_layers']
FEAT_DIM    = 32     # stand-in for CodeBERT hidden size (768 in the real model)
NB_CLASS    = 2
K_MIX       = 0.1    # self.k

CONV1 = dict(in_channels=N_NODES, out_channels=8, kernel_size=3, padding=1)
CONV2 = dict(in_channels=8, out_channels=4, kernel_size=1, padding=0)
MP1   = dict(kernel_size=3, stride=2)
MP2   = dict(kernel_size=2, stride=2)

N_TOT  = B * N_NODES         # 16 nodes total
NB_BLK = 2 * B               # 4 (branch, batch) blocks: (Z,b0),(Z,b1),(Y,b0),(Y,b1)

# MXU operand dtype: jnp.bfloat16 on v6e/v7x at production sizes (keep
# preferred_element_type=f32 and all VPU/EUP math in f32); f32 here for exactness.
MXU_DTYPE = jnp.float32


def _pool_len(L, mp):
    return (L - mp["kernel_size"]) // mp["stride"] + 1


# derived conv-module lengths
L_Z   = GGNN_OUT + EMB_SIZE                                  # 48 (Z-branch conv1 out len)
L_PAD = L_Z + 2 * CONV1["padding"]                           # 50 (shared padded slab len)
P1    = _pool_len(L_Z, MP1)                                  # 23
P2    = _pool_len(P1, MP2)                                   # 11
L_Y   = GGNN_OUT                                             # 32 (Y-branch conv1 out len)
P1Y   = _pool_len(L_Y, MP1)                                  # 15
PY2   = _pool_len(P1Y, MP2)                                  # 7
F1    = CONV2["out_channels"] * P2                           # 44 = fc1 in_features
F2    = CONV2["out_channels"] * PY2                          # 28 = fc2 in_features


# ------------------ parameter-slab layout (row offsets, 128 lanes wide) --------
def _build_layout():
    off = 0
    lay = {}

    def take(name, rows):
        nonlocal off
        lay[name] = off
        off = (off + rows + 7) // 8 * 8          # keep every block 8-sublane aligned
    take("wf",   GGNN_LAYERS * GGNN_OUT)          # L blocks of [C, 128] (gates in 0..95)
    take("whh",  GGNN_OUT)                        # [C, 128]
    take("bih",  1)                               # [1, 128]
    take("bhh",  1)                               # [1, 128]
    take("w1",   NB_BLK * CONV1["out_channels"])  # fused-tap conv1 weight [32, 96]
    take("b1",   NB_BLK * CONV1["out_channels"])  # [32, 1]
    take("w2",   NB_BLK * CONV2["out_channels"])  # block-diag conv2 weight [16, 32]
    take("b2",   NB_BLK * CONV2["out_channels"])  # [16, 1]
    take("sel1", L_Z - MP1["kernel_size"] + 1)    # maxpool1 stride selection [46, 23]
    take("sel2", P1 - MP2["kernel_size"] + 1)     # maxpool2 stride selection [22, 11]
    take("wfc",  NB_BLK * CONV2["out_channels"])  # fc weights over conv row blocks [16, 11]
    take("seg",  NB_BLK)                          # block-sum matrix [4, 16]
    take("fcb",  NB_BLK)                          # fc biases [4, 1]
    take("clsw", FEAT_DIM)                        # classifier weight [32, 2]
    take("clsb", 1)                               # classifier bias [1, 2]
    lay["rows"] = off
    return lay


LAYOUT     = _build_layout()
PARAM_ROWS = LAYOUT["rows"]                       # 384
PARAM_COLS = 128


# --------------------------- fused forward kernel -----------------------------
def bert_ggcn_kernel(x0_ref, a_ref, cls_ref, prm_ref, out_ref, slab_ref,
                     *, num_layers, channels, batch, k_mix):
    f32 = jnp.float32
    C   = channels
    NB  = 2 * batch
    CO1 = CONV1["out_channels"]
    CO2 = CONV2["out_channels"]
    K1  = CONV1["kernel_size"]
    CIN1 = 2 * N_TOT                 # conv1 input rows (branch x batch x node) = 32
    L1   = L_Z                       # conv1 output length = 48

    def mx(v):                       # MXU operand cast (f32 here; bf16 on v6e/v7x)
        return v.astype(MXU_DTYPE)

    # ---------------- GatedGraphConv: gates packed in lanes 0..3*C-1 --------------
    h = x0_ref[...]                                            # [N_TOT, C] (x zero-padded)
    A = a_ref[...]                                             # [N_TOT, N_TOT], A[dst, src]
    whh = prm_ref[LAYOUT["whh"]:LAYOUT["whh"] + C, :]          # [C, 128]
    bih = prm_ref[LAYOUT["bih"]:LAYOUT["bih"] + 1, :]          # [1, 128]
    bhh = prm_ref[LAYOUT["bhh"]:LAYOUT["bhh"] + 1, :]          # [1, 128]
    for l in range(num_layers):
        wf_l = prm_ref[LAYOUT["wf"] + l * C:LAYOUT["wf"] + (l + 1) * C, :]   # [C, 128]
        p  = jnp.dot(mx(h), mx(wf_l), preferred_element_type=f32)            # [N_TOT, 128]
        gi = jnp.dot(mx(A), mx(p), preferred_element_type=f32) + bih         # propagate+bih
        gh = jnp.dot(mx(h), mx(whh), preferred_element_type=f32) + bhh
        g  = gi + gh
        r = jax.nn.sigmoid(g[:, 0:C])
        z = jax.nn.sigmoid(g[:, C:2 * C])
        n = jnp.tanh(gi[:, 2 * C:3 * C] + r * gh[:, 2 * C:3 * C])
        h = (1.0 - z) * n + z * h                                             # GRUCell(m, h)
    hidden = h                                                 # [N_TOT, C]
    x_feat = x0_ref[:, 0:EMB_SIZE]                             # raw node features

    # ---------------- Conv module: both branches / both batches in one slab -------
    # Zero-initialised scratch; signal stored at static lane offsets (lane 0 / lane 49
    # stay zero = conv1 padding).  Rows 0..15 = Z branch, rows 16..31 = Y branch.
    slab_ref[...] = jnp.zeros(slab_ref.shape, f32)
    slab_ref[0:N_TOT, 1:1 + C] = hidden
    slab_ref[0:N_TOT, 1 + C:1 + C + EMB_SIZE] = x_feat
    slab_ref[N_TOT:2 * N_TOT, 1:1 + C] = hidden
    xall = slab_ref[...]                                       # [2*N_TOT, 128]

    # conv1 (K=3): taps stacked on the contraction axis -> ONE MXU dot
    x3 = jnp.concatenate([xall[:, 0:L1], xall[:, 1:1 + L1], xall[:, 2:2 + L1]],
                         axis=0)                               # [3*CIN1, 48] = [96, 48]
    w1 = prm_ref[LAYOUT["w1"]:LAYOUT["w1"] + NB * CO1, 0:K1 * CIN1]          # [32, 96]
    b1 = prm_ref[LAYOUT["b1"]:LAYOUT["b1"] + NB * CO1, 0:1]                  # [32, 1]
    h1 = jnp.maximum(jnp.dot(mx(w1), mx(x3), preferred_element_type=f32) + b1, 0.0)

    # maxpool1 (K=3, S=2): windowed max + stride-selection matmul
    m3 = jnp.maximum(jnp.maximum(h1[:, 0:L1 - 2], h1[:, 1:L1 - 1]), h1[:, 2:L1])  # [32, 46]
    sel1 = prm_ref[LAYOUT["sel1"]:LAYOUT["sel1"] + (L1 - MP1["kernel_size"] + 1), 0:P1]
    p1 = jnp.dot(mx(m3), mx(sel1), preferred_element_type=f32)               # [32, 23]

    # conv2 (K=1) + relu
    w2 = prm_ref[LAYOUT["w2"]:LAYOUT["w2"] + NB * CO2, 0:NB * CO1]           # [16, 32]
    b2 = prm_ref[LAYOUT["b2"]:LAYOUT["b2"] + NB * CO2, 0:1]                  # [16, 1]
    h2 = jnp.maximum(jnp.dot(mx(w2), mx(p1), preferred_element_type=f32) + b2, 0.0)

    # maxpool2 (K=2, S=2)
    m2 = jnp.maximum(h2[:, 0:P1 - 1], h2[:, 1:P1])                           # [16, 22]
    sel2 = prm_ref[LAYOUT["sel2"]:LAYOUT["sel2"] + (P1 - MP2["kernel_size"] + 1), 0:P2]
    p2 = jnp.dot(mx(m2), mx(sel2), preferred_element_type=f32)               # [16, 11]

    # fc1(Z) * fc2(Y): fc weights laid over the conv-output row blocks
    wfc = prm_ref[LAYOUT["wfc"]:LAYOUT["wfc"] + NB * CO2, 0:P2]              # [16, 11]
    seg = prm_ref[LAYOUT["seg"]:LAYOUT["seg"] + NB, 0:NB * CO2]              # [4, 16]
    fcb = prm_ref[LAYOUT["fcb"]:LAYOUT["fcb"] + NB, 0:1]                     # [4, 1]
    zy = jnp.dot(mx(seg), mx(p2 * wfc), preferred_element_type=f32)          # [4, 11]
    zy = jnp.sum(zy, axis=1, keepdims=True) + fcb                            # [4, 1]
    res = zy[0:batch, :] * zy[batch:2 * batch, :]                            # [B, 1]

    # ---------------- classifier + mix + log (same semantics as the PyTorch module) -
    clsw = prm_ref[LAYOUT["clsw"]:LAYOUT["clsw"] + FEAT_DIM, 0:NB_CLASS]     # [32, 2]
    clsb = prm_ref[LAYOUT["clsb"]:LAYOUT["clsb"] + 1, 0:NB_CLASS]            # [1, 2]
    cls_logit = jnp.dot(mx(cls_ref[...]), mx(clsw),
                        preferred_element_type=f32) + clsb                   # [B, 2]
    pred = (res + 1e-10) * k_mix + cls_logit * (1.0 - k_mix)                 # [B,1] bcast
    # NOTE: log of a raw mix exactly as in the reference; assumes the classifier bias
    # keeps the argument positive (numerically fragile by construction of the module).
    out_ref[...] = jnp.log(pred)


# ------------------------------ host-side glue ---------------------------------
def build_dense_adjacency(edge_index, num_nodes):
    # A[dst, src] = edge multiplicity (GatedGraphConv 'add' aggregation over incoming
    # edges). Built ONCE per (static) graph, outside the forward.
    # TODO(synk): for large/dynamic graphs, stream edges via PrefetchScalarGridSpec and
    # tile by destination-node row blocks instead of a dense O(N^2) VMEM matrix.
    src, dst = edge_index[0], edge_index[1]
    return jnp.zeros((num_nodes, num_nodes), jnp.float32).at[dst, src].add(1.0)


def prepare_kernel_params(p):
    """One-time repacking of PyTorch-layout params into ONE [384, 128] slab."""
    f32 = jnp.float32
    C, L, NB = GGNN_OUT, GGNN_LAYERS, NB_BLK
    co1, ci1, k1 = CONV1["out_channels"], CONV1["in_channels"], CONV1["kernel_size"]
    co2, ci2 = CONV2["out_channels"], CONV2["in_channels"]

    # ---- invariants the fused layout relies on (review: make them explicit) --------
    assert 3 * C <= 128, "GRU gates must fit one 128-lane group"
    assert EMB_SIZE <= C and 1 + C + EMB_SIZE + 1 == L_PAD <= 128
    assert ci2 == co1 and F1 == co2 * P2 and F2 == co2 * PY2
    # Y branch is embedded in the longer Z-length slab: the first PY2 pooled columns
    # must only read conv/pool positions that exist in the true length-L_Y branch.
    assert MP1["stride"] * (P1Y - 1) + MP1["kernel_size"] <= L_Y
    assert MP2["stride"] * (PY2 - 1) + MP2["kernel_size"] <= P1Y
    assert PY2 <= P2

    S = jnp.zeros((PARAM_ROWS, PARAM_COLS), f32)

    # --- GGNN: fold W[l] @ Wih, gates contiguous in lanes 0..3C-1 --------------------
    wfull = jnp.einsum("lij,jk->lik", p["ggnn_w"], p["gru_wih_t"])            # [L, C, 3C]
    S = S.at[LAYOUT["wf"]:LAYOUT["wf"] + L * C, 0:3 * C].set(wfull.reshape(L * C, 3 * C))
    S = S.at[LAYOUT["whh"]:LAYOUT["whh"] + C, 0:3 * C].set(p["gru_whh_t"])
    S = S.at[LAYOUT["bih"], 0:3 * C].set(p["gru_bih"][0])
    S = S.at[LAYOUT["bhh"], 0:3 * C].set(p["gru_bhh"][0])

    # --- conv1: fused-tap block-diagonal weight over (branch, batch) blocks ----------
    w1t = jnp.transpose(p["conv1_w"], (2, 0, 1))                              # [K, Cout, Cin]
    w1cat = jnp.zeros((NB * co1, k1 * NB * ci1), f32)
    for k in range(k1):
        for blk in range(NB):
            r0, c0 = blk * co1, k * NB * ci1 + blk * ci1
            w1cat = w1cat.at[r0:r0 + co1, c0:c0 + ci1].set(w1t[k])
    S = S.at[LAYOUT["w1"]:LAYOUT["w1"] + NB * co1, 0:k1 * NB * ci1].set(w1cat)
    S = S.at[LAYOUT["b1"]:LAYOUT["b1"] + NB * co1, 0:1].set(jnp.tile(p["conv1_b"], (NB, 1)))

    # --- conv2: block-diagonal weight -------------------------------------------------
    w2bd = jnp.zeros((NB * co2, NB * ci2), f32)
    for blk in range(NB):
        w2bd = w2bd.at[blk * co2:(blk + 1) * co2,
                       blk * ci2:(blk + 1) * ci2].set(p["conv2_w"][:, :, 0])
    S = S.at[LAYOUT["w2"]:LAYOUT["w2"] + NB * co2, 0:NB * ci2].set(w2bd)
    S = S.at[LAYOUT["b2"]:LAYOUT["b2"] + NB * co2, 0:1].set(jnp.tile(p["conv2_b"], (NB, 1)))

    # --- maxpool stride-selection matrices (windowed max happens in-kernel) ----------
    n_m3 = L_Z - MP1["kernel_size"] + 1                                       # 46
    sel1 = jnp.zeros((n_m3, P1), f32)
    sel1 = sel1.at[MP1["stride"] * jnp.arange(P1), jnp.arange(P1)].set(1.0)
    n_m2 = P1 - MP2["kernel_size"] + 1                                        # 22
    sel2 = jnp.zeros((n_m2, P2), f32)
    sel2 = sel2.at[MP2["stride"] * jnp.arange(P2), jnp.arange(P2)].set(1.0)
    S = S.at[LAYOUT["sel1"]:LAYOUT["sel1"] + n_m3, 0:P1].set(sel1)
    S = S.at[LAYOUT["sel2"]:LAYOUT["sel2"] + n_m2, 0:P2].set(sel2)

    # --- fc weights laid over conv-output row blocks; fc2 zero-padded past PY2 -------
    fc1_2d = p["fc1_w_t"].reshape(co2, P2)
    fc2_2d = jnp.zeros((co2, P2), f32).at[:, :PY2].set(p["fc2_w_t"].reshape(co2, PY2))
    wfc = jnp.concatenate([jnp.tile(fc1_2d, (B, 1)), jnp.tile(fc2_2d, (B, 1))], axis=0)
    S = S.at[LAYOUT["wfc"]:LAYOUT["wfc"] + NB * co2, 0:P2].set(wfc)
    seg = jnp.zeros((NB, NB * co2), f32)
    for i in range(NB):
        seg = seg.at[i, i * co2:(i + 1) * co2].set(1.0)
    S = S.at[LAYOUT["seg"]:LAYOUT["seg"] + NB, 0:NB * co2].set(seg)
    fcb = jnp.concatenate([jnp.tile(p["fc1_b"], (B, 1)), jnp.tile(p["fc2_b"], (B, 1))], axis=0)
    S = S.at[LAYOUT["fcb"]:LAYOUT["fcb"] + NB, 0:1].set(fcb)

    # --- classifier -------------------------------------------------------------------
    S = S.at[LAYOUT["clsw"]:LAYOUT["clsw"] + FEAT_DIM, 0:NB_CLASS].set(p["cls_w_t"])
    S = S.at[LAYOUT["clsb"], 0:NB_CLASS].set(p["cls_b"][0])
    return S


def bert_ggcn_forward(x, A, cls_feats, param_slab):
    # initial GGNN state h0 = x zero-padded to out_channels (host-side, one tiny pad)
    x0 = jnp.pad(x, ((0, 0), (0, GGNN_OUT - EMB_SIZE)))
    vmem = pl.BlockSpec(memory_space=pltpu.MemorySpace.VMEM)
    kernel = pl.pallas_call(
        functools.partial(bert_ggcn_kernel,
                          num_layers=GGNN_LAYERS, channels=GGNN_OUT,
                          batch=B, k_mix=K_MIX),
        # NOTE: at real batch sizes emit a lane-dense output slab (last dim a multiple of
        # 128) and slice to [B, 2] in the wrapper; negligible at B=2.
        out_shape=jax.ShapeDtypeStruct((B, NB_CLASS), jnp.float32),
        in_specs=[vmem] * 4,
        out_specs=vmem,
        scratch_shapes=[pltpu.VMEM((2 * N_TOT, 128), jnp.float32)],
    )
    return kernel(x0, A, cls_feats, param_slab)


# ----------------- pure-JAX reference (un-fused / un-folded math) --------------
def reference_forward(x, A, cls_feats, p):
    C = GGNN_OUT
    h = jnp.pad(x, ((0, 0), (0, C - EMB_SIZE)))
    for l in range(GGNN_LAYERS):
        m = A @ (h @ p["ggnn_w"][l])
        gi = m @ p["gru_wih_t"] + p["gru_bih"]
        gh = h @ p["gru_whh_t"] + p["gru_bhh"]
        r = jax.nn.sigmoid(gi[:, :C] + gh[:, :C])
        z = jax.nn.sigmoid(gi[:, C:2 * C] + gh[:, C:2 * C])
        n = jnp.tanh(gi[:, 2 * C:] + r * gh[:, 2 * C:])
        h = (1.0 - z) * n + z * h

    def conv1d(xb, w, b):
        K = w.shape[2]
        L = xb.shape[2] - K + 1
        out = sum(jnp.einsum("oc,bcl->bol", w[:, :, k], xb[:, :, k:k + L]) for k in range(K))
        return out + b[None, :, :]

    def maxpool1d(xb, K, S):
        Lo = (xb.shape[2] - K) // S + 1
        return jnp.stack([xb[:, :, q * S:q * S + K].max(axis=2) for q in range(Lo)], axis=2)

    def branch(feat):
        xb = feat.reshape(B, N_NODES, feat.shape[1])
        xb = jnp.pad(xb, ((0, 0), (0, 0), (CONV1["padding"], CONV1["padding"])))
        h1 = jnp.maximum(conv1d(xb, p["conv1_w"], p["conv1_b"]), 0.0)
        h1 = maxpool1d(h1, MP1["kernel_size"], MP1["stride"])
        h2 = jnp.maximum(conv1d(h1, p["conv2_w"], p["conv2_b"]), 0.0)
        h2 = maxpool1d(h2, MP2["kernel_size"], MP2["stride"])
        return h2.reshape(B, -1)

    Zf = branch(jnp.concatenate([h, x], axis=1))
    Yf = branch(h)
    res = (Zf @ p["fc1_w_t"] + p["fc1_b"]) * (Yf @ p["fc2_w_t"] + p["fc2_b"])
    cls_logit = cls_feats @ p["cls_w_t"] + p["cls_b"]
    return jnp.log((res + 1e-10) * K_MIX + cls_logit * (1 - K_MIX))


# ------------------------- deterministic parameter init -----------------------
def init_params(key):
    ks = jax.random.split(key, 12)

    def nrm(k, shape, scale=0.1):
        return scale * jax.random.normal(k, shape, jnp.float32)

    return {
        # GatedGraphConv weights: [num_layers, C, C]; GRUCell weights stored transposed
        "ggnn_w":    nrm(ks[0], (GGNN_LAYERS, GGNN_OUT, GGNN_OUT)),
        "gru_wih_t": nrm(ks[1], (GGNN_OUT, 3 * GGNN_OUT)),
        "gru_whh_t": nrm(ks[2], (GGNN_OUT, 3 * GGNN_OUT)),
        "gru_bih":   nrm(ks[3], (1, 3 * GGNN_OUT)),
        "gru_bhh":   nrm(ks[4], (1, 3 * GGNN_OUT)),
        # Conv module
        "conv1_w":   nrm(ks[5], (CONV1["out_channels"], CONV1["in_channels"], CONV1["kernel_size"])),
        "conv1_b":   nrm(ks[6], (CONV1["out_channels"], 1)),
        "conv2_w":   nrm(ks[7], (CONV2["out_channels"], CONV2["in_channels"], CONV2["kernel_size"])),
        "conv2_b":   nrm(ks[8], (CONV2["out_channels"], 1)),
        "fc1_w_t":   nrm(ks[9], (F1, 1)),
        "fc1_b":     jnp.full((1, 1), 0.5, jnp.float32),
        "fc2_w_t":   nrm(ks[10], (F2, 1)),
        "fc2_b":     jnp.full((1, 1), 0.5, jnp.float32),
        # classifier Linear(feat_dim, nb_class); bias keeps the log argument positive
        "cls_w_t":   nrm(ks[11], (FEAT_DIM, NB_CLASS), scale=0.05),
        "cls_b":     jnp.full((1, NB_CLASS), 1.5, jnp.float32),
    }


if __name__ == "__main__":
    key = jax.random.PRNGKey(0)
    k_x, k_cls, k_par = jax.random.split(key, 3)

    # node features (data.x) and a deterministic edge_index (two rings per graph)
    x = jax.random.normal(k_x, (B * N_NODES, EMB_SIZE), jnp.float32)
    src, dst = [], []
    for g in range(B):
        for i in range(N_NODES):
            src.append(g * N_NODES + i); dst.append(g * N_NODES + (i + 1) % N_NODES)
            src.append(g * N_NODES + i); dst.append(g * N_NODES + (i + 3) % N_NODES)
    edge_index = jnp.array([src, dst], dtype=jnp.int32)
    A = build_dense_adjacency(edge_index, B * N_NODES)        # built once (static graph)

    # stand-in for bert_model(...)[0][:, 0]   (see TODO(synk) above)
    cls_feats = jax.random.normal(k_cls, (B, FEAT_DIM), jnp.float32)

    params = init_params(k_par)
    param_slab = prepare_kernel_params(params)                # one-time host repacking

    fwd = jax.jit(bert_ggcn_forward)
    pred = jax.block_until_ready(fwd(x, A, cls_feats, param_slab))
    assert pred.shape == (B, NB_CLASS) and pred.dtype == jnp.float32

    # correctness check against the un-fused pure-JAX reference
    ref = jax.block_until_ready(reference_forward(x, A, cls_feats, params))
    assert jnp.allclose(pred, ref, rtol=5e-2, atol=5e-2), (pred, ref)

    print("KERNEL_OK")
</pallas_src>

<mosaic_0001>
module attributes {stable_mosaic.version = 11 : i64} {
  func.func @bert_ggcn_kernel(%arg0: memref<16x32xf32, #tpu.memory_space<vmem>>, %arg1: memref<16x16xf32, #tpu.memory_space<vmem>>, %arg2: memref<2x32xf32, #tpu.memory_space<vmem>>, %arg3: memref<384x128xf32, #tpu.memory_space<vmem>>, %arg4: memref<2x2xf32, #tpu.memory_space<vmem>>, %arg5: memref<32x128xf32, #tpu.memory_space<vmem>>) attributes {dimension_semantics = [], scalar_prefetch = 0 : i64, scratch_operands = 1 : i64, tpu.core_type = #tpu.core_type<tc>} {
    %c0 = arith.constant 0 : index
    %c0_0 = arith.constant 0 : index
    %0 = vector.load %arg0[%c0, %c0_0] : memref<16x32xf32, #tpu.memory_space<vmem>>, vector<16x32xf32>
    %c0_1 = arith.constant 0 : index
    %c0_2 = arith.constant 0 : index
    %1 = vector.load %arg1[%c0_1, %c0_2] : memref<16x16xf32, #tpu.memory_space<vmem>>, vector<16x16xf32>
    %c96 = arith.constant 96 : index
    %c0_3 = arith.constant 0 : index
    %2 = vector.load %arg3[%c96, %c0_3] : memref<384x128xf32, #tpu.memory_space<vmem>>, vector<32x128xf32>
    %c128 = arith.constant 128 : index
    %c0_4 = arith.constant 0 : index
    %3 = vector.load %arg3[%c128, %c0_4] : memref<384x128xf32, #tpu.memory_space<vmem>>, vector<1x128xf32>
    %c136 = arith.constant 136 : index
    %c0_5 = arith.constant 0 : index
    %4 = vector.load %arg3[%c136, %c0_5] : memref<384x128xf32, #tpu.memory_space<vmem>>, vector<1x128xf32>
    %c0_6 = arith.constant 0 : index
    %c0_7 = arith.constant 0 : index
    %5 = vector.load %arg3[%c0_6, %c0_7] : memref<384x128xf32, #tpu.memory_space<vmem>>, vector<32x128xf32>
    %cst = arith.constant dense<0.000000e+00> : vector<16x128xf32>
    %6 = tpu.matmul %0, %5, %cst {dimension_numbers = #tpu.dot_dimension_numbers<[1], [0], [0], [1], [0, 0, 1, 1], [], []>} : vector<16x32xf32>, vector<32x128xf32>, vector<16x128xf32> -> vector<16x128xf32>
    %cst_8 = arith.constant dense<0.000000e+00> : vector<16x128xf32>
    %7 = tpu.matmul %1, %6, %cst_8 {dimension_numbers = #tpu.dot_dimension_numbers<[1], [0], [0], [1], [0, 0, 1, 1], [], []>} : vector<16x16xf32>, vector<16x128xf32>, vector<16x128xf32> -> vector<16x128xf32>
    %8 = vector.broadcast %3 : vector<1x128xf32> to vector<16x128xf32>
    %9 = arith.addf %7, %8 : vector<16x128xf32>
    %cst_9 = arith.constant dense<0.000000e+00> : vector<16x128xf32>
    %10 = tpu.matmul %0, %2, %cst_9 {dimension_numbers = #tpu.dot_dimension_numbers<[1], [0], [0], [1], [0, 0, 1, 1], [], []>} : vector<16x32xf32>, vector<32x128xf32>, vector<16x128xf32> -> vector<16x128xf32>
    %11 = vector.broadcast %4 : vector<1x128xf32> to vector<16x128xf32>
    %12 = arith.addf %10, %11 : vector<16x128xf32>
    %13 = arith.addf %9, %12 : vector<16x128xf32>
    %14 = vector.extract_strided_slice %13 {offsets = [0, 0], sizes = [16, 32], strides = [1, 1]} : vector<16x128xf32> to vector<16x32xf32>
    %15 = arith.negf %14 : vector<16x32xf32>
    %16 = math.exp %15 : vector<16x32xf32>
    %cst_10 = arith.constant 1.000000e+00 : f32
    %17 = vector.broadcast %cst_10 : f32 to vector<16x32xf32>
    %18 = arith.addf %17, %16 : vector<16x32xf32>
    %19 = arith.divf %17, %18 : vector<16x32xf32>
    %20 = vector.extract_strided_slice %13 {offsets = [0, 32], sizes = [16, 32], strides = [1, 1]} : vector<16x128xf32> to vector<16x32xf32>
    %21 = arith.negf %20 : vector<16x32xf32>
    %22 = math.exp %21 : vector<16x32xf32>
    %cst_11 = arith.constant 1.000000e+00 : f32
    %23 = vector.broadcast %cst_11 : f32 to vector<16x32xf32>
    %24 = arith.addf %23, %22 : vector<16x32xf32>
    %25 = arith.divf %23, %24 : vector<16x32xf32>
    %26 = vector.extract_strided_slice %9 {offsets = [0, 64], sizes = [16, 32], strides = [1, 1]} : vector<16x128xf32> to vector<16x32xf32>
    %27 = vector.extract_strided_slice %12 {offsets = [0, 64], sizes = [16, 32], strides = [1, 1]} : vector<16x128xf32> to vector<16x32xf32>
    %28 = arith.mulf %19, %27 : vector<16x32xf32>
    %29 = arith.addf %26, %28 : vector<16x32xf32>
    %30 = math.tanh %29 : vector<16x32xf32>
    %cst_12 = arith.constant 1.000000e+00 : f32
    %31 = vector.broadcast %cst_12 : f32 to vector<16x32xf32>
    %32 = arith.subf %31, %25 : vector<16x32xf32>
    %33 = arith.mulf %32, %30 : vector<16x32xf32>
    %34 = arith.mulf %25, %0 : vector<16x32xf32>
    %35 = arith.addf %33, %34 : vector<16x32xf32>
    %c32 = arith.constant 32 : index
    %c0_13 = arith.constant 0 : index
    %36 = vector.load %arg3[%c32, %c0_13] : memref<384x128xf32, #tpu.memory_space<vmem>>, vector<32x128xf32>
    %cst_14 = arith.constant dense<0.000000e+00> : vector<16x128xf32>
    %37 = tpu.matmul %35, %36, %cst_14 {dimension_numbers = #tpu.dot_dimension_numbers<[1], [0], [0], [1], [0, 0, 1, 1], [], []>} : vector<16x32xf32>, vector<32x128xf32>, vector<16x128xf32> -> vector<16x128xf32>
    %cst_15 = arith.constant dense<0.000000e+00> : vector<16x128xf32>
    %38 = tpu.matmul %1, %37, %cst_15 {dimension_numbers = #tpu.dot_dimension_numbers<[1], [0], [0], [1], [0, 0, 1, 1], [], []>} : vector<16x16xf32>, vector<16x128xf32>, vector<16x128xf32> -> vector<16x128xf32>
    %39 = vector.broadcast %3 : vector<1x128xf32> to vector<16x128xf32>
    %40 = arith.addf %38, %39 : vector<16x128xf32>
    %cst_16 = arith.constant dense<0.000000e+00> : vector<16x128xf32>
    %41 = tpu.matmul %35, %2, %cst_16 {dimension_numbers = #tpu.dot_dimension_numbers<[1], [0], [0], [1], [0, 0, 1, 1], [], []>} : vector<16x32xf32>, vector<32x128xf32>, vector<16x128xf32> -> vector<16x128xf32>
    %42 = vector.broadcast %4 : vector<1x128xf32> to vector<16x128xf32>
    %43 = arith.addf %41, %42 : vector<16x128xf32>
    %44 = arith.addf %40, %43 : vector<16x128xf32>
    %45 = vector.extract_strided_slice %44 {offsets = [0, 0], sizes = [16, 32], strides = [1, 1]} : vector<16x128xf32> to vector<16x32xf32>
    %46 = arith.negf %45 : vector<16x32xf32>
    %47 = math.exp %46 : vector<16x32xf32>
    %cst_17 = arith.constant 1.000000e+00 : f32
    %48 = vector.broadcast %cst_17 : f32 to vector<16x32xf32>
    %49 = arith.addf %48, %47 : vector<16x32xf32>
    %50 = arith.divf %48, %49 : vector<16x32xf32>
    %51 = vector.extract_strided_slice %44 {offsets = [0, 32], sizes = [16, 32], strides = [1, 1]} : vector<16x128xf32> to vector<16x32xf32>
    %52 = arith.negf %51 : vector<16x32xf32>
    %53 = math.exp %52 : vector<16x32xf32>
    %cst_18 = arith.constant 1.000000e+00 : f32
    %54 = vector.broadcast %cst_18 : f32 to vector<16x32xf32>
    %55 = arith.addf %54, %53 : vector<16x32xf32>
    %56 = arith.divf %54, %55 : vector<16x32xf32>
    %57 = vector.extract_strided_slice %40 {offsets = [0, 64], sizes = [16, 32], strides = [1, 1]} : vector<16x128xf32> to vector<16x32xf32>
    %58 = vector.extract_strided_slice %43 {offsets = [0, 64], sizes = [16, 32], strides = [1, 1]} : vector<16x128xf32> to vector<16x32xf32>
    %59 = arith.mulf %50, %58 : vector<16x32xf32>
    %60 = arith.addf %57, %59 : vector<16x32xf32>
    %61 = math.tanh %60 : vector<16x32xf32>
    %cst_19 = arith.constant 1.000000e+00 : f32
    %62 = vector.broadcast %cst_19 : f32 to vector<16x32xf32>
    %63 = arith.subf %62, %56 : vector<16x32xf32>
    %64 = arith.mulf %63, %61 : vector<16x32xf32>
    %65 = arith.mulf %56, %35 : vector<16x32xf32>
    %66 = arith.addf %64, %65 : vector<16x32xf32>
    %c64 = arith.constant 64 : index
    %c0_20 = arith.constant 0 : index
    %67 = vector.load %arg3[%c64, %c0_20] : memref<384x128xf32, #tpu.memory_space<vmem>>, vector<32x128xf32>
    %cst_21 = arith.constant dense<0.000000e+00> : vector<16x128xf32>
    %68 = tpu.matmul %66, %67, %cst_21 {dimension_numbers = #tpu.dot_dimension_numbers<[1], [0], [0], [1], [0, 0, 1, 1], [], []>} : vector<16x32xf32>, vector<32x128xf32>, vector<16x128xf32> -> vector<16x128xf32>
    %cst_22 = arith.constant dense<0.000000e+00> : vector<16x128xf32>
    %69 = tpu.matmul %1, %68, %cst_22 {dimension_numbers = #tpu.dot_dimension_numbers<[1], [0], [0], [1], [0, 0, 1, 1], [], []>} : vector<16x16xf32>, vector<16x128xf32>, vector<16x128xf32> -> vector<16x128xf32>
    %70 = vector.broadcast %3 : vector<1x128xf32> to vector<16x128xf32>
    %71 = arith.addf %69, %70 : vector<16x128xf32>
    %cst_23 = arith.constant dense<0.000000e+00> : vector<16x128xf32>
    %72 = tpu.matmul %66, %2, %cst_23 {dimension_numbers = #tpu.dot_dimension_numbers<[1], [0], [0], [1], [0, 0, 1, 1], [], []>} : vector<16x32xf32>, vector<32x128xf32>, vector<16x128xf32> -> vector<16x128xf32>
    %73 = vector.broadcast %4 : vector<1x128xf32> to vector<16x128xf32>
    %74 = arith.addf %72, %73 : vector<16x128xf32>
    %75 = arith.addf %71, %74 : vector<16x128xf32>
    %76 = vector.extract_strided_slice %75 {offsets = [0, 0], sizes = [16, 32], strides = [1, 1]} : vector<16x128xf32> to vector<16x32xf32>
    %77 = arith.negf %76 : vector<16x32xf32>
    %78 = math.exp %77 : vector<16x32xf32>
    %cst_24 = arith.constant 1.000000e+00 : f32
    %79 = vector.broadcast %cst_24 : f32 to vector<16x32xf32>
    %80 = arith.addf %79, %78 : vector<16x32xf32>
    %81 = arith.divf %79, %80 : vector<16x32xf32>
    %82 = vector.extract_strided_slice %75 {offsets = [0, 32], sizes = [16, 32], strides = [1, 1]} : vector<16x128xf32> to vector<16x32xf32>
    %83 = arith.negf %82 : vector<16x32xf32>
    %84 = math.exp %83 : vector<16x32xf32>
    %cst_25 = arith.constant 1.000000e+00 : f32
    %85 = vector.broadcast %cst_25 : f32 to vector<16x32xf32>
    %86 = arith.addf %85, %84 : vector<16x32xf32>
    %87 = arith.divf %85, %86 : vector<16x32xf32>
    %88 = vector.extract_strided_slice %71 {offsets = [0, 64], sizes = [16, 32], strides = [1, 1]} : vector<16x128xf32> to vector<16x32xf32>
    %89 = vector.extract_strided_slice %74 {offsets = [0, 64], sizes = [16, 32], strides = [1, 1]} : vector<16x128xf32> to vector<16x32xf32>
    %90 = arith.mulf %81, %89 : vector<16x32xf32>
    %91 = arith.addf %88, %90 : vector<16x32xf32>
    %92 = math.tanh %91 : vector<16x32xf32>
    %cst_26 = arith.constant 1.000000e+00 : f32
    %93 = vector.broadcast %cst_26 : f32 to vector<16x32xf32>
    %94 = arith.subf %93, %87 : vector<16x32xf32>
    %95 = arith.mulf %94, %92 : vector<16x32xf32>
    %96 = arith.mulf %87, %66 : vector<16x32xf32>
    %97 = arith.addf %95, %96 : vector<16x32xf32>
    %c0_27 = arith.constant 0 : index
    %c0_28 = arith.constant 0 : index
    %98 = vector.load %arg0[%c0_27, %c0_28] : memref<16x32xf32, #tpu.memory_space<vmem>>, vector<16x16xf32>
    %cst_29 = arith.constant 0.000000e+00 : f32
    %99 = vector.broadcast %cst_29 : f32 to vector<32x128xf32>
    %c0_30 = arith.constant 0 : index
    %c0_31 = arith.constant 0 : index
    %100 = vector.load %arg5[%c0_30, %c0_31] : memref<32x128xf32, #tpu.memory_space<vmem>>, vector<32x128xf32>
    tpu.vector_store %arg5[%c0_30, %c0_31], %99 {strides = array<i32>} : memref<32x128xf32, #tpu.memory_space<vmem>>, vector<32x128xf32>,
    %c0_32 = arith.constant 0 : index
    %c1 = arith.constant 1 : index
    %101 = vector.load %arg5[%c0_32, %c1] : memref<32x128xf32, #tpu.memory_space<vmem>>, vector<16x32xf32>
    tpu.vector_store %arg5[%c0_32, %c1], %97 {strides = array<i32>} : memref<32x128xf32, #tpu.memory_space<vmem>>, vector<16x32xf32>,
    %c0_33 = arith.constant 0 : index
    %c33 = arith.constant 33 : index
    %102 = vector.load %arg5[%c0_33, %c33] : memref<32x128xf32, #tpu.memory_space<vmem>>, vector<16x16xf32>
    tpu.vector_store %arg5[%c0_33, %c33], %98 {strides = array<i32>} : memref<32x128xf32, #tpu.memory_space<vmem>>, vector<16x16xf32>,
    %c16 = arith.constant 16 : index
    %c1_34 = arith.constant 1 : index
    %103 = vector.load %arg5[%c16, %c1_34] : memref<32x128xf32, #tpu.memory_space<vmem>>, vector<16x32xf32>
    tpu.vector_store %arg5[%c16, %c1_34], %97 {strides = array<i32>} : memref<32x128xf32, #tpu.memory_space<vmem>>, vector<16x32xf32>,
    %c0_35 = arith.constant 0 : index
    %c0_36 = arith.constant 0 : index
    %104 = vector.load %arg5[%c0_35, %c0_36] : memref<32x128xf32, #tpu.memory_space<vmem>>, vector<32x128xf32>
    %105 = vector.extract_strided_slice %104 {offsets = [0, 0], sizes = [32, 48], strides = [1, 1]} : vector<32x128xf32> to vector<32x48xf32>
    %106 = vector.extract_strided_slice %104 {offsets = [0, 1], sizes = [32, 48], strides = [1, 1]} : vector<32x128xf32> to vector<32x48xf32>
    %107 = vector.extract_strided_slice %104 {offsets = [0, 2], sizes = [32, 48], strides = [1, 1]} : vector<32x128xf32> to vector<32x48xf32>
    %108 = tpu.concatenate %105, %106, %107 in 0 : vector<32x48xf32>, vector<32x48xf32>, vector<32x48xf32> -> vector<96x48xf32>
    %c144 = arith.constant 144 : index
    %c0_37 = arith.constant 0 : index
    %109 = vector.load %arg3[%c144, %c0_37] : memref<384x128xf32, #tpu.memory_space<vmem>>, vector<32x96xf32>
    %c176 = arith.constant 176 : index
    %c0_38 = arith.constant 0 : index
    %110 = vector.load %arg3[%c176, %c0_38] : memref<384x128xf32, #tpu.memory_space<vmem>>, vector<32x1xf32>
    %cst_39 = arith.constant dense<0.000000e+00> : vector<32x48xf32>
    %111 = tpu.matmul %109, %108, %cst_39 {dimension_numbers = #tpu.dot_dimension_numbers<[1], [0], [0], [1], [0, 0, 1, 1], [], []>} : vector<32x96xf32>, vector<96x48xf32>, vector<32x48xf32> -> vector<32x48xf32>
    %112 = vector.broadcast %110 : vector<32x1xf32> to vector<32x48xf32>
    %113 = arith.addf %111, %112 : vector<32x48xf32>
    %cst_40 = arith.constant 0.000000e+00 : f32
    %114 = vector.broadcast %cst_40 : f32 to vector<32x48xf32>
    %115 = arith.maximumf %113, %114 : vector<32x48xf32>
    %116 = vector.extract_strided_slice %115 {offsets = [0, 0], sizes = [32, 46], strides = [1, 1]} : vector<32x48xf32> to vector<32x46xf32>
    %117 = vector.extract_strided_slice %115 {offsets = [0, 1], sizes = [32, 46], strides = [1, 1]} : vector<32x48xf32> to vector<32x46xf32>
    %118 = arith.maximumf %116, %117 : vector<32x46xf32>
    %119 = vector.extract_strided_slice %115 {offsets = [0, 2], sizes = [32, 46], strides = [1, 1]} : vector<32x48xf32> to vector<32x46xf32>
    %120 = arith.maximumf %118, %119 : vector<32x46xf32>
    %c240 = arith.constant 240 : index
    %c0_41 = arith.constant 0 : index
    %121 = vector.load %arg3[%c240, %c0_41] : memref<384x128xf32, #tpu.memory_space<vmem>>, vector<46x23xf32>
    %cst_42 = arith.constant dense<0.000000e+00> : vector<32x23xf32>
    %122 = tpu.matmul %120, %121, %cst_42 {dimension_numbers = #tpu.dot_dimension_numbers<[1], [0], [0], [1], [0, 0, 1, 1], [], []>} : vector<32x46xf32>, vector<46x23xf32>, vector<32x23xf32> -> vector<32x23xf32>
    %c208 = arith.constant 208 : index
    %c0_43 = arith.constant 0 : index
    %123 = vector.load %arg3[%c208, %c0_43] : memref<384x128xf32, #tpu.memory_space<vmem>>, vector<16x32xf32>
    %c224 = arith.constant 224 : index
    %c0_44 = arith.constant 0 : index
    %124 = vector.load %arg3[%c224, %c0_44] : memref<384x128xf32, #tpu.memory_space<vmem>>, vector<16x1xf32>
    %cst_45 = arith.constant dense<0.000000e+00> : vector<16x23xf32>
    %125 = tpu.matmul %123, %122, %cst_45 {dimension_numbers = #tpu.dot_dimension_numbers<[1], [0], [0], [1], [0, 0, 1, 1], [], []>} : vector<16x32xf32>, vector<32x23xf32>, vector<16x23xf32> -> vector<16x23xf32>
    %126 = vector.broadcast %124 : vector<16x1xf32> to vector<16x23xf32>
    %127 = arith.addf %125, %126 : vector<16x23xf32>
    %cst_46 = arith.constant 0.000000e+00 : f32
    %128 = vector.broadcast %cst_46 : f32 to vector<16x23xf32>
    %129 = arith.maximumf %127, %128 : vector<16x23xf32>
    %130 = vector.extract_strided_slice %129 {offsets = [0, 0], sizes = [16, 22], strides = [1, 1]} : vector<16x23xf32> to vector<16x22xf32>
    %131 = vector.extract_strided_slice %129 {offsets = [0, 1], sizes = [16, 22], strides = [1, 1]} : vector<16x23xf32> to vector<16x22xf32>
    %132 = arith.maximumf %130, %131 : vector<16x22xf32>
    %c288 = arith.constant 288 : index
    %c0_47 = arith.constant 0 : index
    %133 = vector.load %arg3[%c288, %c0_47] : memref<384x128xf32, #tpu.memory_space<vmem>>, vector<22x11xf32>
    %cst_48 = arith.constant dense<0.000000e+00> : vector<16x11xf32>
    %134 = tpu.matmul %132, %133, %cst_48 {dimension_numbers = #tpu.dot_dimension_numbers<[1], [0], [0], [1], [0, 0, 1, 1], [], []>} : vector<16x22xf32>, vector<22x11xf32>, vector<16x11xf32> -> vector<16x11xf32>
    %c312 = arith.constant 312 : index
    %c0_49 = arith.constant 0 : index
    %135 = vector.load %arg3[%c312, %c0_49] : memref<384x128xf32, #tpu.memory_space<vmem>>, vector<16x11xf32>
    %c328 = arith.constant 328 : index
    %c0_50 = arith.constant 0 : index
    %136 = vector.load %arg3[%c328, %c0_50] : memref<384x128xf32, #tpu.memory_space<vmem>>, vector<4x16xf32>
    %c336 = arith.constant 336 : index
    %c0_51 = arith.constant 0 : index
    %137 = vector.load %arg3[%c336, %c0_51] : memref<384x128xf32, #tpu.memory_space<vmem>>, vector<4x1xf32>
    %138 = arith.mulf %134, %135 : vector<16x11xf32>
    %cst_52 = arith.constant dense<0.000000e+00> : vector<4x11xf32>
    %139 = tpu.matmul %136, %138, %cst_52 {dimension_numbers = #tpu.dot_dimension_numbers<[1], [0], [0], [1], [0, 0, 1, 1], [], []>} : vector<4x16xf32>, vector<16x11xf32>, vector<4x11xf32> -> vector<4x11xf32>
    %cst_53 = arith.constant dense<0.000000e+00> : vector<4xf32>
    %140 = vector.multi_reduction <add>, %139, %cst_53 [1] : vector<4x11xf32> to vector<4xf32>
    %141 = vector.shape_cast %140 : vector<4xf32> to vector<4x1xf32>
    %142 = arith.addf %141, %137 : vector<4x1xf32>
    %143 = vector.extract_strided_slice %142 {offsets = [0, 0], sizes = [2, 1], strides = [1, 1]} : vector<4x1xf32> to vector<2x1xf32>
    %144 = vector.extract_strided_slice %142 {offsets = [2, 0], sizes = [2, 1], strides = [1, 1]} : vector<4x1xf32> to vector<2x1xf32>
    %145 = arith.mulf %143, %144 : vector<2x1xf32>
    %c344 = arith.constant 344 : index
    %c0_54 = arith.constant 0 : index
    %146 = vector.load %arg3[%c344, %c0_54] : memref<384x128xf32, #tpu.memory_space<vmem>>, vector<32x2xf32>
    %c376 = arith.constant 376 : index
    %c0_55 = arith.constant 0 : index
    %147 = vector.load %arg3[%c376, %c0_55] : memref<384x128xf32, #tpu.memory_space<vmem>>, vector<1x2xf32>
    %c0_56 = arith.constant 0 : index
    %c0_57 = arith.constant 0 : index
    %148 = vector.load %arg2[%c0_56, %c0_57] : memref<2x32xf32, #tpu.memory_space<vmem>>, vector<2x32xf32>
    %cst_58 = arith.constant dense<0.000000e+00> : vector<2x2xf32>
    %149 = tpu.matmul %148, %146, %cst_58 {dimension_numbers = #tpu.dot_dimension_numbers<[1], [0], [0], [1], [0, 0, 1, 1], [], []>} : vector<2x32xf32>, vector<32x2xf32>, vector<2x2xf32> -> vector<2x2xf32>
    %150 = vector.broadcast %147 : vector<1x2xf32> to vector<2x2xf32>
    %151 = arith.addf %149, %150 : vector<2x2xf32>
    %cst_59 = arith.constant 1.000000e-10 : f32
    %152 = vector.broadcast %cst_59 : f32 to vector<2x1xf32>
    %153 = arith.addf %145, %152 : vector<2x1xf32>
    %cst_60 = arith.constant 1.000000e-01 : f32
    %154 = vector.broadcast %cst_60 : f32 to vector<2x1xf32>
    %155 = arith.mulf %153, %154 : vector<2x1xf32>
    %cst_61 = arith.constant 0.899999976 : f32
    %156 = vector.broadcast %cst_61 : f32 to vector<2x2xf32>
    %157 = arith.mulf %151, %156 : vector<2x2xf32>
    %158 = vector.broadcast %155 : vector<2x1xf32> to vector<2x2xf32>
    %159 = arith.addf %158, %157 : vector<2x2xf32>
    %160 = math.log %159 : vector<2x2xf32>
    %c0_62 = arith.constant 0 : index
    %c0_63 = arith.constant 0 : index
    %161 = vector.load %arg4[%c0_62, %c0_63] : memref<2x2xf32, #tpu.memory_space<vmem>>, vector<2x2xf32>
    tpu.vector_store %arg4[%c0_62, %c0_63], %160 {strides = array<i32>} : memref<2x2xf32, #tpu.memory_space<vmem>>, vector<2x2xf32>,
    return
  }
}

</mosaic_0001>

<llo_original>
// kernel: bert_ggcn_forward.1
$region0: #{bert_ggcn_forward.1}
  #allocation0 [shape = 'u32[]', space=smem, size = 0x4, offset = 0x4, fixed_abs, tag = 'smem constant byte address 0x4 - core index']
  #allocation1 [shape = 'u32[144,128]{1,0:T(1,128)}', space=vmem, size = 0x12000, scoped, tag = 'internal scratch']
  #allocation2 [shape = 'f32[32,128]{1,0:T(8,128)}', space=vmem, size = 0x4000, scoped, tag = 'scratch operand']
  %s0 = inlined_call_operand.vmem [shape: f32[16,32], index: 0, kind: input, shape index: {}]
  %s1 = inlined_call_operand.vmem [shape: f32[16,16], index: 1, kind: input, shape index: {}]
  %s2 = inlined_call_operand.vmem [shape: f32[2,32], index: 2, kind: input, shape index: {}]
  %s3 = inlined_call_operand.hbm [shape: f32[384,128], index: 3, kind: input, shape index: {}]
  %s4 = inlined_call_operand.hbm [shape: f32[2,2], index: 4, kind: output, shape index: {}]
  %s5 = sld [smem:[#allocation0]]
  $region30: #{bert_ggcn_forward.1} parent=0
    _
  %s7 = ssub.s32 1, %s5
  %s8 = scalar_select 0, %s7, %s5
  $region1: #{bert_ggcn_forward.1} parent=0
    #allocation3 [shape = 'u8[196608]{0}', space=vmem, size = 0x30000, scoped, tag = 'input window, operand 3, single buffered']
    #allocation4 [shape = 's32[1]{0}', space=sflag, size = 0x4, scoped, tag = 'scoped memory for bert_ggcn_forward.1']
    #allocation5 [shape = 's32[1]{0}', space=sflag, size = 0x4, scoped, tag = 'scoped memory for bert_ggcn_forward.1']
    #allocation6 [shape = 'u8[1024]{0}', space=vmem, size = 0x400, scoped, tag = 'output window, operand 0, single buffered']
    %9 = vsyncpa [#allocation4], 0
    %10 = vsyncpa [#allocation5], 0
    // Predicated region
    $region2: #{bert_ggcn_forward.1} parent=1 // pred_check
      _
    $region3: #{bert_ggcn_forward.1} parent=1 // pred_check_branch
      %12 = sbr.rel (0) target = $region5
    $region4: #{bert_ggcn_forward.1} parent=1 // pred_region
      _
    $region5: #{bert_ggcn_forward.1} parent=1 // pred_fallthru
      _
    // Predicated region
    $region6: #{bert_ggcn_forward.1} parent=1 // pred_check
      _
    $region7: #{bert_ggcn_forward.1} parent=1 // pred_check_branch
      %14 = sbr.rel (0) target = $region9
    $region8: #{bert_ggcn_forward.1} parent=1 // pred_region
      _
    $region9: #{bert_ggcn_forward.1} parent=1 // pred_fallthru
      _
    // Predicated region
    $region10: #{bert_ggcn_forward.1} parent=1 // pred_check
      _
    $region11: #{bert_ggcn_forward.1} parent=1 // pred_check_branch
      %16 = sbr.rel (0) target = $region13
    $region12: #{bert_ggcn_forward.1} parent=1 // pred_region
      _
    $region13: #{bert_ggcn_forward.1} parent=1 // pred_fallthru
      _
    // Predicated region
    $region14: #{bert_ggcn_forward.1} parent=1 // pred_check
      _
    $region15: #{bert_ggcn_forward.1} parent=1 // pred_check_branch
      %18 = sbr.rel (0) target = $region17
    $region16: #{bert_ggcn_forward.1} parent=1 // pred_region
      %s20 = ssub.s32 6144, 6144
      %21 = vsyncadd [#allocation4], %s20
      %s22 = sshll.u32 [#allocation3], 4
      %s23 = int_to_ptr.vmem [resolvable:$true] %s22
      %28 = dma.hbm_to_vmem [thread:$0]  %s3, 6144, %s23, [#allocation4], 128, 128, 8
    $region17: #{bert_ggcn_forward.1} parent=1 // pred_fallthru
      _
    // Predicated region
    $region18: #{bert_ggcn_forward.1} parent=1 // pred_check
      _
    $region19: #{bert_ggcn_forward.1} parent=1 // pred_check_branch
      %30 = sbr.rel (0) target = $region21
    $region20: #{bert_ggcn_forward.1} parent=1 // pred_region
      %31 = dma.done [#allocation4], 6144
    $region21: #{bert_ggcn_forward.1} parent=1 // pred_fallthru
      _
    %v32 = vld [vmem:[%s0] sm:$0xff]
    %v33 = vld [vmem:[%s0 + $0x8] sm:$0xff]
    %v34 = vld [vmem:[%s1] sm:$0xff]
    %v35 = vld [vmem:[%s1 + $0x8] sm:$0xff]
    %v36 = vld [vmem:[#allocation3 + $0x60] sm:$0xff]
    %v37 = vld [vmem:[#allocation3 + $0x68] sm:$0xff]
    %v38 = vld [vmem:[#allocation3 + $0x70] sm:$0xff]
    %v39 = vld [vmem:[#allocation3 + $0x78] sm:$0xff]
    %v40 = vld [vmem:[#allocation3 + $0x80] sm:$0x1]
    %v41 = vld [vmem:[#allocation3 + $0x88] sm:$0x1]
    %v42 = vld [vmem:[#allocation3] sm:$0xff]
    %v43 = vld [vmem:[#allocation3 + $0x8] sm:$0xff]
    %v44 = vld [vmem:[#allocation3 + $0x10] sm:$0xff]
    %v45 = vld [vmem:[#allocation3 + $0x18] sm:$0xff]
    %vm46 = vcmask 261120
    %v48 = vsel %vm46, %v32, 0
    %v51 = vsel %vm46, %v33, 0
    %53 = vmatprep.subr.mxu0 0.0
    %54 = vmatpush1.msra.mxu0 %v42
    %55 = vmatprep.subr.mxu0 0.0
    %56 = vmatpush1.msra.mxu0 %v43
    %57 = vmatprep.subr.mxu0 0.0
    %58 = vmatpush1.msra.mxu0 %v44
    %59 = vmatprep.subr.mxu0 0.0
    %60 = vmatpush1.msra.mxu0 %v45
    %61 = vmatprep.subr.mxu0 0.0
    %62 = vmatpush1.msra.mxu0 0.0
    %63 = vmatprep.subr.mxu0 0.0
    %64 = vmatpush1.msra.mxu0 0.0
    %65 = vmatprep.subr.mxu0 0.0
    %66 = vmatpush1.msra.mxu0 0.0
    %67 = vmatprep.subr.mxu0 0.0
    %68 = vmatpush1.msra.mxu0 0.0
    %69 = vmatprep.subr.mxu0 0.0
    %70 = vmatpush1.msra.mxu0 0.0
    %71 = vmatprep.subr.mxu0 0.0
    %72 = vmatpush1.msra.mxu0 0.0
    %73 = vmatprep.subr.mxu0 0.0
    %74 = vmatpush1.msra.mxu0 0.0
    %75 = vmatprep.subr.mxu0 0.0
    %76 = vmatpush1.msra.mxu0 0.0
    %77 = vmatprep.subr.mxu0 0.0
    %78 = vmatpush1.msra.mxu0 0.0
    %79 = vmatprep.subr.mxu0 0.0
    %80 = vmatpush1.msra.mxu0 0.0
    %81 = vmatprep.subr.mxu0 0.0
    %82 = vmatpush1.msra.mxu0 0.0
    %83 = vmatprep.subr.mxu0 0.0
    %84 = vmatpush1.msra.mxu0 0.0
    %85 = vmatprep.subr.mxu0 0.0
    %86 = vmatpush1.msra.mxu0 0.0
    %87 = vmatprep.subr.mxu0 0.0
    %88 = vmatpush1.msra.mxu0 0.0
    %89 = vmatprep.subr.mxu0 0.0
    %90 = vmatpush1.msra.mxu0 0.0
    %91 = vmatprep.subr.mxu0 0.0
    %92 = vmatpush1.msra.mxu0 0.0
    %93 = vmatprep.subr.mxu0 0.0
    %94 = vmatpush1.msra.mxu0 0.0
    %95 = vmatprep.subr.mxu0 0.0
    %96 = vmatpush1.msra.mxu0 0.0
    %97 = vmatprep.subr.mxu0 0.0
    %98 = vmatpush1.msra.mxu0 0.0
    %99 = vmatprep.subr.mxu0 0.0
    %100 = vmatpush1.msra.mxu0 0.0
    %101 = vmatprep.subr.mxu0 0.0
    %102 = vmatpush1.msra.mxu0 0.0
    %103 = vmatprep.subr.mxu0 0.0
    %104 = vmatpush1.msra.mxu0 0.0
    %105 = vmatprep.subr.mxu0 0.0
    %106 = vmatpush1.msra.mxu0 0.0
    %107 = vmatprep.subr.mxu0 0.0
    %108 = vmatpush1.msra.mxu0 0.0
    %109 = vmatprep.subr.mxu0 0.0
    %110 = vmatpush1.msra.mxu0 0.0
    %111 = vmatprep.subr.mxu0 0.0
    %112 = vmatpush1.msra.mxu0 0.0
    %113 = vmatprep.subr.mxu0 0.0
    %114 = vmatpush1.msra.mxu0 0.0
    %115 = vmatprep.subr.mxu0 0.0
    %116 = vmatpush1.msra.mxu0 0.0
    %117 = vmatprep.mubr.f32.mxu0 0.0
    %118 = vmatmul.mubr.f32.gmra.mrb[0].mxu0 %v48
    %v119 = vpop.f32.mrb[0].mxu0
    %v120 = vadd.f32 0.0, %v119
    %v121 = vpop.f32.mrb[0].mxu0
    %122 = vmatprep.mubr.f32.mxu0 0.0
    %123 = vmatmul.mubr.f32.gmra.mrb[0].mxu0 %v51
    %v124 = vpop.f32.mrb[0].mxu0
    %v125 = vadd.f32 0.0, %v124
    %v126 = vpop.f32.mrb[0].mxu0
    %127 = vdwg.mxu0
    %v128 = vlaneseq
    %v129 = vshrl.u32 %v128, 7
    %v130 = vsub.s32 0, %v129
    %v131 = vrot.slane %v40, %v130
    %vm132 = vcmask 130048
    %v134 = vsel %vm132, %v34, 0
    %v137 = vsel %vm132, %v35, 0
    %139 = vmatprep.subr.mxu0 0.0
    %140 = vmatpush1.msra.mxu0 %v120
    %141 = vmatprep.subr.mxu0 0.0
    %142 = vmatpush1.msra.mxu0 %v125
    %143 = vmatprep.subr.mxu0 0.0
    %144 = vmatpush1.msra.mxu0 0.0
    %145 = vmatprep.subr.mxu0 0.0
    %146 = vmatpush1.msra.mxu0 0.0
    %147 = vmatprep.subr.mxu0 0.0
    %148 = vmatpush1.msra.mxu0 0.0
    %149 = vmatprep.subr.mxu0 0.0
    %150 = vmatpush1.msra.mxu0 0.0
    %151 = vmatprep.subr.mxu0 0.0
    %152 = vmatpush1.msra.mxu0 0.0
    %153 = vmatprep.subr.mxu0 0.0
    %154 = vmatpush1.msra.mxu0 0.0
    %155 = vmatprep.subr.mxu0 0.0
    %156 = vmatpush1.msra.mxu0 0.0
    %157 = vmatprep.subr.mxu0 0.0
    %158 = vmatpush1.msra.mxu0 0.0
    %159 = vmatprep.subr.mxu0 0.0
    %160 = vmatpush1.msra.mxu0 0.0
    %161 = vmatprep.subr.mxu0 0.0
    %162 = vmatpush1.msra.mxu0 0.0
    %163 = vmatprep.subr.mxu0 0.0
    %164 = vmatpush1.msra.mxu0 0.0
    %165 = vmatprep.subr.mxu0 0.0
    %166 = vmatpush1.msra.mxu0 0.0
    %167 = vmatprep.subr.mxu0 0.0
    %168 = vmatpush1.msra.mxu0 0.0
    %169 = vmatprep.subr.mxu0 0.0
    %170 = vmatpush1.msra.mxu0 0.0
    %171 = vmatprep.subr.mxu0 0.0
    %172 = vmatpush1.msra.mxu0 0.0
    %173 = vmatprep.subr.mxu0 0.0
    %174 = vmatpush1.msra.mxu0 0.0
    %175 = vmatprep.subr.mxu0 0.0
    %176 = vmatpush1.msra.mxu0 0.0
    %177 = vmatprep.subr.mxu0 0.0
    %178 = vmatpush1.msra.mxu0 0.0
    %179 = vmatprep.subr.mxu0 0.0
    %180 = vmatpush1.msra.mxu0 0.0
    %181 = vmatprep.subr.mxu0 0.0
    %182 = vmatpush1.msra.mxu0 0.0
    %183 = vmatprep.subr.mxu0 0.0
    %184 = vmatpush1.msra.mxu0 0.0
    %185 = vmatprep.subr.mxu0 0.0
    %186 = vmatpush1.msra.mxu0 0.0
    %187 = vmatprep.subr.mxu0 0.0
    %188 = vmatpush1.msra.mxu0 0.0
    %189 = vmatprep.subr.mxu0 0.0
    %190 = vmatpush1.msra.mxu0 0.0
    %191 = vmatprep.subr.mxu0 0.0
    %192 = vmatpush1.msra.mxu0 0.0
    %193 = vmatprep.subr.mxu0 0.0
    %194 = vmatpush1.msra.mxu0 0.0
    %195 = vmatprep.subr.mxu0 0.0
    %196 = vmatpush1.msra.mxu0 0.0
    %197 = vmatprep.subr.mxu0 0.0
    %198 = vmatpush1.msra.mxu0 0.0
    %199 = vmatprep.subr.mxu0 0.0
    %200 = vmatpush1.msra.mxu0 0.0
    %201 = vmatprep.subr.mxu0 0.0
    %202 = vmatpush1.msra.mxu0 0.0
    %203 = vmatprep.mubr.f32.mxu0 0.0
    %204 = vmatmul.mubr.f32.gmra.mrb[0].mxu0 %v134
    %v205 = vpop.f32.mrb[0].mxu0
    %v206 = vadd.f32 %v131, %v205
    %v207 = vpop.f32.mrb[0].mxu0
    %208 = vmatprep.mubr.f32.mxu0 0.0
    %209 = vmatmul.mubr.f32.gmra.mrb[0].mxu0 %v137
    %v210 = vpop.f32.mrb[0].mxu0
    %v211 = vadd.f32 %v131, %v210
    %v212 = vpop.f32.mrb[0].mxu0
    %213 = vdwg.mxu0
    %v214 = vlaneseq
    %v215 = vshrl.u32 %v214, 7
    %v216 = vsub.s32 0, %v215
    %v217 = vrot.slane %v41, %v216
    %218 = vmatprep.subr.mxu0 0.0
    %219 = vmatpush1.msra.mxu0 %v36
    %220 = vmatprep.subr.mxu0 0.0
    %221 = vmatpush1.msra.mxu0 %v37
    %222 = vmatprep.subr.mxu0 0.0
    %223 = vmatpush1.msra.mxu0 %v38
    %224 = vmatprep.subr.mxu0 0.0
    %225 = vmatpush1.msra.mxu0 %v39
    %226 = vmatprep.subr.mxu0 0.0
    %227 = vmatpush1.msra.mxu0 0.0
    %228 = vmatprep.subr.mxu0 0.0
    %229 = vmatpush1.msra.mxu0 0.0
    %230 = vmatprep.subr.mxu0 0.0
    %231 = vmatpush1.msra.mxu0 0.0
    %232 = vmatprep.subr.mxu0 0.0
    %233 = vmatpush1.msra.mxu0 0.0
    %234 = vmatprep.subr.mxu0 0.0
    %235 = vmatpush1.msra.mxu0 0.0
    %236 = vmatprep.subr.mxu0 0.0
    %237 = vmatpush1.msra.mxu0 0.0
    %238 = vmatprep.subr.mxu0 0.0
    %239 = vmatpush1.msra.mxu0 0.0
    %240 = vmatprep.subr.mxu0 0.0
    %241 = vmatpush1.msra.mxu0 0.0
    %242 = vmatprep.subr.mxu0 0.0
    %243 = vmatpush1.msra.mxu0 0.0
    %244 = vmatprep.subr.mxu0 0.0
    %245 = vmatpush1.msra.mxu0 0.0
    %246 = vmatprep.subr.mxu0 0.0
    %247 = vmatpush1.msra.mxu0 0.0
    %248 = vmatprep.subr.mxu0 0.0
    %249 = vmatpush1.msra.mxu0 0.0
    %250 = vmatprep.subr.mxu0 0.0
    %251 = vmatpush1.msra.mxu0 0.0
    %252 = vmatprep.subr.mxu0 0.0
    %253 = vmatpush1.msra.mxu0 0.0
    %254 = vmatprep.subr.mxu0 0.0
    %255 = vmatpush1.msra.mxu0 0.0
    %256 = vmatprep.subr.mxu0 0.0
    %257 = vmatpush1.msra.mxu0 0.0
    %258 = vmatprep.subr.mxu0 0.0
    %259 = vmatpush1.msra.mxu0 0.0
    %260 = vmatprep.subr.mxu0 0.0
    %261 = vmatpush1.msra.mxu0 0.0
    %262 = vmatprep.subr.mxu0 0.0
    %263 = vmatpush1.msra.mxu0 0.0
    %264 = vmatprep.subr.mxu0 0.0
    %265 = vmatpush1.msra.mxu0 0.0
    %266 = vmatprep.subr.mxu0 0.0
    %267 = vmatpush1.msra.mxu0 0.0
    %268 = vmatprep.subr.mxu0 0.0
    %269 = vmatpush1.msra.mxu0 0.0
    %270 = vmatprep.subr.mxu0 0.0
    %271 = vmatpush1.msra.mxu0 0.0
    %272 = vmatprep.subr.mxu0 0.0
    %273 = vmatpush1.msra.mxu0 0.0
    %274 = vmatprep.subr.mxu0 0.0
    %275 = vmatpush1.msra.mxu0 0.0
    %276 = vmatprep.subr.mxu0 0.0
    %277 = vmatpush1.msra.mxu0 0.0
    %278 = vmatprep.subr.mxu0 0.0
    %279 = vmatpush1.msra.mxu0 0.0
    %280 = vmatprep.subr.mxu0 0.0
    %281 = vmatpush1.msra.mxu0 0.0
    %282 = vmatprep.mubr.f32.mxu0 0.0
    %283 = vmatmul.mubr.f32.gmra.mrb[0].mxu0 %v48
    %v284 = vpop.f32.mrb[0].mxu0
    %v285 = vadd.f32 %v217, %v284
    %v286 = vpop.f32.mrb[0].mxu0
    %287 = vmatprep.mubr.f32.mxu0 0.0
    %288 = vmatmul.mubr.f32.gmra.mrb[0].mxu0 %v51
    %v289 = vpop.f32.mrb[0].mxu0
    %v290 = vadd.f32 %v217, %v289
    %v291 = vpop.f32.mrb[0].mxu0
    %292 = vdwg.mxu0
    %v293 = vadd.f32 %v206, %v285
    %v294 = vadd.f32 %v211, %v290
    %v295 = vxor.u32 %v293, 2147483648
    %v296 = vxor.u32 %v294, 2147483648
    %v297 = vmul.f32 %v295, 1.442695
    %v298 = vpow.pop %v297
    %v299 = vmul.f32 %v296, 1.442695
    %v300 = vpow.pop %v299
    %v301 = vadd.f32 %v298, 1.0
    %v302 = vadd.f32 %v300, 1.0
    %v303 = vrcp.pop %v301
    %v304 = vmul.f32 1.0, %v303
    %v305 = vrcp.pop %v302
    %v306 = vmul.f32 1.0, %v305
    %309 = vrot.lane.b32.xlu0 %v285, 64
    %v310 = vpop.permute.xlu0 %309
    %311 = vrot.lane.b32.xlu0 %v290, 64
    %v312 = vpop.permute.xlu0 %311
    %v315 = vmul.f32 %v304, %v310
    %v316 = vmul.f32 %v306, %v312
    %319 = vrot.lane.b32.xlu0 %v315, 64
    %v320 = vpop.permute.xlu0 %319
    %321 = vrot.lane.b32.xlu0 %v316, 64
    %v322 = vpop.permute.xlu0 %321
    %v325 = vadd.f32 %v206, %v320
    %v326 = vadd.f32 %v211, %v322
    %v327 = vtanh.pop %v325
    %v328 = vtanh.pop %v326
    %v329 = vsub.f32 1.0, %v304
    %v330 = vsub.f32 1.0, %v306
    %333 = vrot.lane.b32.xlu0 %v327, 96
    %v334 = vpop.permute.xlu0 %333
    %335 = vrot.lane.b32.xlu0 %v328, 96
    %v336 = vpop.permute.xlu0 %335
    %v339 = vmul.f32 %v329, %v334
    %v340 = vmul.f32 %v330, %v336
    %341 = vrot.lane.b32.xlu0 %v32, 32
    %v342 = vpop.permute.xlu0 %341
    %343 = vrot.lane.b32.xlu0 %v33, 32
    %v344 = vpop.permute.xlu0 %343
    %v347 = vmul.f32 %v304, %v342
    %v348 = vmul.f32 %v306, %v344
    %v349 = vadd.f32 %v339, %v347
    %v350 = vadd.f32 %v340, %v348
    %v351 = vld [vmem:[#allocation3 + $0x20] sm:$0xff]
    %v352 = vld [vmem:[#allocation3 + $0x28] sm:$0xff]
    %v353 = vld [vmem:[#allocation3 + $0x30] sm:$0xff]
    %v354 = vld [vmem:[#allocation3 + $0x38] sm:$0xff]
    %357 = vrot.lane.b32.xlu0 %v349, 96
    %v358 = vpop.permute.xlu0 %357
    %359 = vrot.lane.b32.xlu0 %v350, 96
    %v360 = vpop.permute.xlu0 %359
    %v361 = vsel %vm46, %v358, 0
    %v363 = vsel %vm46, %v360, 0
    %365 = vmatprep.subr.mxu0 0.0
    %366 = vmatpush1.msra.mxu0 %v351
    %367 = vmatprep.subr.mxu0 0.0
    %368 = vmatpush1.msra.mxu0 %v352
    %369 = vmatprep.subr.mxu0 0.0
    %370 = vmatpush1.msra.mxu0 %v353
    %371 = vmatprep.subr.mxu0 0.0
    %372 = vmatpush1.msra.mxu0 %v354
    %373 = vmatprep.subr.mxu0 0.0
    %374 = vmatpush1.msra.mxu0 0.0
    %375 = vmatprep.subr.mxu0 0.0
    %376 = vmatpush1.msra.mxu0 0.0
    %377 = vmatprep.subr.mxu0 0.0
    %378 = vmatpush1.msra.mxu0 0.0
    %379 = vmatprep.subr.mxu0 0.0
    %380 = vmatpush1.msra.mxu0 0.0
    %381 = vmatprep.subr.mxu0 0.0
    %382 = vmatpush1.msra.mxu0 0.0
    %383 = vmatprep.subr.mxu0 0.0
    %384 = vmatpush1.msra.mxu0 0.0
    %385 = vmatprep.subr.mxu0 0.0
    %386 = vmatpush1.msra.mxu0 0.0
    %387 = vmatprep.subr.mxu0 0.0
    %388 = vmatpush1.msra.mxu0 0.0
    %389 = vmatprep.subr.mxu0 0.0
    %390 = vmatpush1.msra.mxu0 0.0
    %391 = vmatprep.subr.mxu0 0.0
    %392 = vmatpush1.msra.mxu0 0.0
    %393 = vmatprep.subr.mxu0 0.0
    %394 = vmatpush1.msra.mxu0 0.0
    %395 = vmatprep.subr.mxu0 0.0
    %396 = vmatpush1.msra.mxu0 0.0
    %397 = vmatprep.subr.mxu0 0.0
    %398 = vmatpush1.msra.mxu0 0.0
    %399 = vmatprep.subr.mxu0 0.0
    %400 = vmatpush1.msra.mxu0 0.0
    %401 = vmatprep.subr.mxu0 0.0
    %402 = vmatpush1.msra.mxu0 0.0
    %403 = vmatprep.subr.mxu0 0.0
    %404 = vmatpush1.msra.mxu0 0.0
    %405 = vmatprep.subr.mxu0 0.0
    %406 = vmatpush1.msra.mxu0 0.0
    %407 = vmatprep.subr.mxu0 0.0
    %408 = vmatpush1.msra.mxu0 0.0
    %409 = vmatprep.subr.mxu0 0.0
    %410 = vmatpush1.msra.mxu0 0.0
    %411 = vmatprep.subr.mxu0 0.0
    %412 = vmatpush1.msra.mxu0 0.0
    %413 = vmatprep.subr.mxu0 0.0
    %414 = vmatpush1.msra.mxu0 0.0
    %415 = vmatprep.subr.mxu0 0.0
    %416 = vmatpush1.msra.mxu0 0.0
    %417 = vmatprep.subr.mxu0 0.0
    %418 = vmatpush1.msra.mxu0 0.0
    %419 = vmatprep.subr.mxu0 0.0
    %420 = vmatpush1.msra.mxu0 0.0
    %421 = vmatprep.subr.mxu0 0.0
    %422 = vmatpush1.msra.mxu0 0.0
    %423 = vmatprep.subr.mxu0 0.0
    %424 = vmatpush1.msra.mxu0 0.0
    %425 = vmatprep.subr.mxu0 0.0
    %426 = vmatpush1.msra.mxu0 0.0
    %427 = vmatprep.subr.mxu0 0.0
    %428 = vmatpush1.msra.mxu0 0.0
    %429 = vmatprep.mubr.f32.mxu0 0.0
    %430 = vmatmul.mubr.f32.gmra.mrb[0].mxu0 %v361
    %v431 = vpop.f32.mrb[0].mxu0
    %v432 = vadd.f32 0.0, %v431
    %v433 = vpop.f32.mrb[0].mxu0
    %434 = vmatprep.mubr.f32.mxu0 0.0
    %435 = vmatmul.mubr.f32.gmra.mrb[0].mxu0 %v363
    %v436 = vpop.f32.mrb[0].mxu0
    %v437 = vadd.f32 0.0, %v436
    %v438 = vpop.f32.mrb[0].mxu0
    %439 = vdwg.mxu0
    %440 = vmatprep.subr.mxu0 0.0
    %441 = vmatpush1.msra.mxu0 %v432
    %442 = vmatprep.subr.mxu0 0.0
    %443 = vmatpush1.msra.mxu0 %v437
    %444 = vmatprep.subr.mxu0 0.0
    %445 = vmatpush1.msra.mxu0 0.0
    %446 = vmatprep.subr.mxu0 0.0
    %447 = vmatpush1.msra.mxu0 0.0
    %448 = vmatprep.subr.mxu0 0.0
    %449 = vmatpush1.msra.mxu0 0.0
    %450 = vmatprep.subr.mxu0 0.0
    %451 = vmatpush1.msra.mxu0 0.0
    %452 = vmatprep.subr.mxu0 0.0
    %453 = vmatpush1.msra.mxu0 0.0
    %454 = vmatprep.subr.mxu0 0.0
    %455 = vmatpush1.msra.mxu0 0.0
    %456 = vmatprep.subr.mxu0 0.0
    %457 = vmatpush1.msra.mxu0 0.0
    %458 = vmatprep.subr.mxu0 0.0
    %459 = vmatpush1.msra.mxu0 0.0
    %460 = vmatprep.subr.mxu0 0.0
    %461 = vmatpush1.msra.mxu0 0.0
    %462 = vmatprep.subr.mxu0 0.0
    %463 = vmatpush1.msra.mxu0 0.0
    %464 = vmatprep.subr.mxu0 0.0
    %465 = vmatpush1.msra.mxu0 0.0
    %466 = vmatprep.subr.mxu0 0.0
    %467 = vmatpush1.msra.mxu0 0.0
    %468 = vmatprep.subr.mxu0 0.0
    %469 = vmatpush1.msra.mxu0 0.0
    %470 = vmatprep.subr.mxu0 0.0
    %471 = vmatpush1.msra.mxu0 0.0
    %472 = vmatprep.subr.mxu0 0.0
    %473 = vmatpush1.msra.mxu0 0.0
    %474 = vmatprep.subr.mxu0 0.0
    %475 = vmatpush1.msra.mxu0 0.0
    %476 = vmatprep.subr.mxu0 0.0
    %477 = vmatpush1.msra.mxu0 0.0
    %478 = vmatprep.subr.mxu0 0.0
    %479 = vmatpush1.msra.mxu0 0.0
    %480 = vmatprep.subr.mxu0 0.0
    %481 = vmatpush1.msra.mxu0 0.0
    %482 = vmatprep.subr.mxu0 0.0
    %483 = vmatpush1.msra.mxu0 0.0
    %484 = vmatprep.subr.mxu0 0.0
    %485 = vmatpush1.msra.mxu0 0.0
    %486 = vmatprep.subr.mxu0 0.0
    %487 = vmatpush1.msra.mxu0 0.0
    %488 = vmatprep.subr.mxu0 0.0
    %489 = vmatpush1.msra.mxu0 0.0
    %490 = vmatprep.subr.mxu0 0.0
    %491 = vmatpush1.msra.mxu0 0.0
    %492 = vmatprep.subr.mxu0 0.0
    %493 = vmatpush1.msra.mxu0 0.0
    %494 = vmatprep.subr.mxu0 0.0
    %495 = vmatpush1.msra.mxu0 0.0
    %496 = vmatprep.subr.mxu0 0.0
    %497 = vmatpush1.msra.mxu0 0.0
    %498 = vmatprep.subr.mxu0 0.0
    %499 = vmatpush1.msra.mxu0 0.0
    %500 = vmatprep.subr.mxu0 0.0
    %501 = vmatpush1.msra.mxu0 0.0
    %502 = vmatprep.subr.mxu0 0.0
    %503 = vmatpush1.msra.mxu0 0.0
    %504 = vmatprep.mubr.f32.mxu0 0.0
    %505 = vmatmul.mubr.f32.gmra.mrb[0].mxu0 %v134
    %v506 = vpop.f32.mrb[0].mxu0
    %v507 = vadd.f32 %v131, %v506
    %v508 = vpop.f32.mrb[0].mxu0
    %509 = vmatprep.mubr.f32.mxu0 0.0
    %510 = vmatmul.mubr.f32.gmra.mrb[0].mxu0 %v137
    %v511 = vpop.f32.mrb[0].mxu0
    %v512 = vadd.f32 %v131, %v511
    %v513 = vpop.f32.mrb[0].mxu0
    %514 = vdwg.mxu0
    %515 = vmatprep.subr.mxu0 0.0
    %516 = vmatpush1.msra.mxu0 %v36
    %517 = vmatprep.subr.mxu0 0.0
    %518 = vmatpush1.msra.mxu0 %v37
    %519 = vmatprep.subr.mxu0 0.0
    %520 = vmatpush1.msra.mxu0 %v38
    %521 = vmatprep.subr.mxu0 0.0
    %522 = vmatpush1.msra.mxu0 %v39
    %523 = vmatprep.subr.mxu0 0.0
    %524 = vmatpush1.msra.mxu0 0.0
    %525 = vmatprep.subr.mxu0 0.0
    %526 = vmatpush1.msra.mxu0 0.0
    %527 = vmatprep.subr.mxu0 0.0
    %528 = vmatpush1.msra.mxu0 0.0
    %529 = vmatprep.subr.mxu0 0.0
    %530 = vmatpush1.msra.mxu0 0.0
    %531 = vmatprep.subr.mxu0 0.0
    %532 = vmatpush1.msra.mxu0 0.0
    %533 = vmatprep.subr.mxu0 0.0
    %534 = vmatpush1.msra.mxu0 0.0
    %535 = vmatprep.subr.mxu0 0.0
    %536 = vmatpush1.msra.mxu0 0.0
    %537 = vmatprep.subr.mxu0 0.0
    %538 = vmatpush1.msra.mxu0 0.0
    %539 = vmatprep.subr.mxu0 0.0
    %540 = vmatpush1.msra.mxu0 0.0
    %541 = vmatprep.subr.mxu0 0.0
    %542 = vmatpush1.msra.mxu0 0.0
    %543 = vmatprep.subr.mxu0 0.0
    %544 = vmatpush1.msra.mxu0 0.0
    %545 = vmatprep.subr.mxu0 0.0
    %546 = vmatpush1.msra.mxu0 0.0
    %547 = vmatprep.subr.mxu0 0.0
    %548 = vmatpush1.msra.mxu0 0.0
    %549 = vmatprep.subr.mxu0 0.0
    %550 = vmatpush1.msra.mxu0 0.0
    %551 = vmatprep.subr.mxu0 0.0
    %552 = vmatpush1.msra.mxu0 0.0
    %553 = vmatprep.subr.mxu0 0.0
    %554 = vmatpush1.msra.mxu0 0.0
    %555 = vmatprep.subr.mxu0 0.0
    %556 = vmatpush1.msra.mxu0 0.0
    %557 = vmatprep.subr.mxu0 0.0
    %558 = vmatpush1.msra.mxu0 0.0
    %559 = vmatprep.subr.mxu0 0.0
    %560 = vmatpush1.msra.mxu0 0.0
    %561 = vmatprep.subr.mxu0 0.0
    %562 = vmatpush1.msra.mxu0 0.0
    %563 = vmatprep.subr.mxu0 0.0
    %564 = vmatpush1.msra.mxu0 0.0
    %565 = vmatprep.subr.mxu0 0.0
    %566 = vmatpush1.msra.mxu0 0.0
    %567 = vmatprep.subr.mxu0 0.0
    %568 = vmatpush1.msra.mxu0 0.0
    %569 = vmatprep.subr.mxu0 0.0
    %570 = vmatpush1.msra.mxu0 0.0
    %571 = vmatprep.subr.mxu0 0.0
    %572 = vmatpush1.msra.mxu0 0.0
    %573 = vmatprep.subr.mxu0 0.0
    %574 = vmatpush1.msra.mxu0 0.0
    %575 = vmatprep.subr.mxu0 0.0
    %576 = vmatpush1.msra.mxu0 0.0
    %577 = vmatprep.subr.mxu0 0.0
    %578 = vmatpush1.msra.mxu0 0.0
    %579 = vmatprep.mubr.f32.mxu0 0.0
    %580 = vmatmul.mubr.f32.gmra.mrb[0].mxu0 %v361
    %v581 = vpop.f32.mrb[0].mxu0
    %v582 = vadd.f32 %v217, %v581
    %v583 = vpop.f32.mrb[0].mxu0
    %584 = vmatprep.mubr.f32.mxu0 0.0
    %585 = vmatmul.mubr.f32.gmra.mrb[0].mxu0 %v363
    %v586 = vpop.f32.mrb[0].mxu0
    %v587 = vadd.f32 %v217, %v586
    %v588 = vpop.f32.mrb[0].mxu0
    %589 = vdwg.mxu0
    %v590 = vadd.f32 %v507, %v582
    %v591 = vadd.f32 %v512, %v587
    %v592 = vxor.u32 %v590, 2147483648
    %v593 = vxor.u32 %v591, 2147483648
    %v594 = vmul.f32 %v592, 1.442695
    %v595 = vpow.pop %v594
    %v596 = vmul.f32 %v593, 1.442695
    %v597 = vpow.pop %v596
    %v598 = vadd.f32 %v595, 1.0
    %v599 = vadd.f32 %v597, 1.0
    %v600 = vrcp.pop %v598
    %v601 = vmul.f32 1.0, %v600
    %v602 = vrcp.pop %v599
    %v603 = vmul.f32 1.0, %v602
    %606 = vrot.lane.b32.xlu0 %v582, 64
    %v607 = vpop.permute.xlu0 %606
    %608 = vrot.lane.b32.xlu0 %v587, 64
    %v609 = vpop.permute.xlu0 %608
    %v612 = vmul.f32 %v601, %v607
    %v613 = vmul.f32 %v603, %v609
    %616 = vrot.lane.b32.xlu0 %v612, 64
    %v617 = vpop.permute.xlu0 %616
    %618 = vrot.lane.b32.xlu0 %v613, 64
    %v619 = vpop.permute.xlu0 %618
    %v622 = vadd.f32 %v507, %v617
    %v623 = vadd.f32 %v512, %v619
    %v624 = vtanh.pop %v622
    %v625 = vtanh.pop %v623
    %v626 = vsub.f32 1.0, %v601
    %v627 = vsub.f32 1.0, %v603
    %630 = vrot.lane.b32.xlu0 %v624, 96
    %v631 = vpop.permute.xlu0 %630
    %632 = vrot.lane.b32.xlu0 %v625, 96
    %v633 = vpop.permute.xlu0 %632
    %v636 = vmul.f32 %v626, %v631
    %v637 = vmul.f32 %v627, %v633
    %v638 = vmul.f32 %v601, %v349
    %v639 = vmul.f32 %v603, %v350
    %v640 = vadd.f32 %v636, %v638
    %v641 = vadd.f32 %v637, %v639
    %v642 = vld [vmem:[#allocation3 + $0x40] sm:$0xff]
    %v643 = vld [vmem:[#allocation3 + $0x48] sm:$0xff]
    %v644 = vld [vmem:[#allocation3 + $0x50] sm:$0xff]
    %v645 = vld [vmem:[#allocation3 + $0x58] sm:$0xff]
    %648 = vrot.lane.b32.xlu0 %v640, 96
    %v649 = vpop.permute.xlu0 %648
    %650 = vrot.lane.b32.xlu0 %v641, 96
    %v651 = vpop.permute.xlu0 %650
    %v652 = vsel %vm46, %v649, 0
    %v654 = vsel %vm46, %v651, 0
    %656 = vmatprep.subr.mxu0 0.0
    %657 = vmatpush1.msra.mxu0 %v642
    %658 = vmatprep.subr.mxu0 0.0
    %659 = vmatpush1.msra.mxu0 %v643
    %660 = vmatprep.subr.mxu0 0.0
    %661 = vmatpush1.msra.mxu0 %v644
    %662 = vmatprep.subr.mxu0 0.0
    %663 = vmatpush1.msra.mxu0 %v645
    %664 = vmatprep.subr.mxu0 0.0
    %665 = vmatpush1.msra.mxu0 0.0
    %666 = vmatprep.subr.mxu0 0.0
    %667 = vmatpush1.msra.mxu0 0.0
    %668 = vmatprep.subr.mxu0 0.0
    %669 = vmatpush1.msra.mxu0 0.0
    %670 = vmatprep.subr.mxu0 0.0
    %671 = vmatpush1.msra.mxu0 0.0
    %672 = vmatprep.subr.mxu0 0.0
    %673 = vmatpush1.msra.mxu0 0.0
    %674 = vmatprep.subr.mxu0 0.0
    %675 = vmatpush1.msra.mxu0 0.0
    %676 = vmatprep.subr.mxu0 0.0
    %677 = vmatpush1.msra.mxu0 0.0
    %678 = vmatprep.subr.mxu0 0.0
    %679 = vmatpush1.msra.mxu0 0.0
    %680 = vmatprep.subr.mxu0 0.0
    %681 = vmatpush1.msra.mxu0 0.0
    %682 = vmatprep.subr.mxu0 0.0
    %683 = vmatpush1.msra.mxu0 0.0
    %684 = vmatprep.subr.mxu0 0.0
    %685 = vmatpush1.msra.mxu0 0.0
    %686 = vmatprep.subr.mxu0 0.0
    %687 = vmatpush1.msra.mxu0 0.0
    %688 = vmatprep.subr.mxu0 0.0
    %689 = vmatpush1.msra.mxu0 0.0
    %690 = vmatprep.subr.mxu0 0.0
    %691 = vmatpush1.msra.mxu0 0.0
    %692 = vmatprep.subr.mxu0 0.0
    %693 = vmatpush1.msra.mxu0 0.0
    %694 = vmatprep.subr.mxu0 0.0
    %695 = vmatpush1.msra.mxu0 0.0
    %696 = vmatprep.subr.mxu0 0.0
    %697 = vmatpush1.msra.mxu0 0.0
    %698 = vmatprep.subr.mxu0 0.0
    %699 = vmatpush1.msra.mxu0 0.0
    %700 = vmatprep.subr.mxu0 0.0
    %701 = vmatpush1.msra.mxu0 0.0
    %702 = vmatprep.subr.mxu0 0.0
    %703 = vmatpush1.msra.mxu0 0.0
    %704 = vmatprep.subr.mxu0 0.0
    %705 = vmatpush1.msra.mxu0 0.0
    %706 = vmatprep.subr.mxu0 0.0
    %707 = vmatpush1.msra.mxu0 0.0
    %708 = vmatprep.subr.mxu0 0.0
    %709 = vmatpush1.msra.mxu0 0.0
    %710 = vmatprep.subr.mxu0 0.0
    %711 = vmatpush1.msra.mxu0 0.0
    %712 = vmatprep.subr.mxu0 0.0
    %713 = vmatpush1.msra.mxu0 0.0
    %714 = vmatprep.subr.mxu0 0.0
    %715 = vmatpush1.msra.mxu0 0.0
    %716 = vmatprep.subr.mxu0 0.0
    %717 = vmatpush1.msra.mxu0 0.0
    %718 = vmatprep.subr.mxu0 0.0
    %719 = vmatpush1.msra.mxu0 0.0
    %720 = vmatprep.mubr.f32.mxu0 0.0
    %721 = vmatmul.mubr.f32.gmra.mrb[0].mxu0 %v652
    %v722 = vpop.f32.mrb[0].mxu0
    %v723 = vadd.f32 0.0, %v722
    %v724 = vpop.f32.mrb[0].mxu0
    %725 = vmatprep.mubr.f32.mxu0 0.0
    %726 = vmatmul.mubr.f32.gmra.mrb[0].mxu0 %v654
    %v727 = vpop.f32.mrb[0].mxu0
    %v728 = vadd.f32 0.0, %v727
    %v729 = vpop.f32.mrb[0].mxu0
    %730 = vdwg.mxu0
    %731 = vmatprep.subr.mxu0 0.0
    %732 = vmatpush1.msra.mxu0 %v723
    %733 = vmatprep.subr.mxu0 0.0
    %734 = vmatpush1.msra.mxu0 %v728
    %735 = vmatprep.subr.mxu0 0.0
    %736 = vmatpush1.msra.mxu0 0.0
    %737 = vmatprep.subr.mxu0 0.0
    %738 = vmatpush1.msra.mxu0 0.0
    %739 = vmatprep.subr.mxu0 0.0
    %740 = vmatpush1.msra.mxu0 0.0
    %741 = vmatprep.subr.mxu0 0.0
    %742 = vmatpush1.msra.mxu0 0.0
    %743 = vmatprep.subr.mxu0 0.0
    %744 = vmatpush1.msra.mxu0 0.0
    %745 = vmatprep.subr.mxu0 0.0
    %746 = vmatpush1.msra.mxu0 0.0
    %747 = vmatprep.subr.mxu0 0.0
    %748 = vmatpush1.msra.mxu0 0.0
    %749 = vmatprep.subr.mxu0 0.0
    %750 = vmatpush1.msra.mxu0 0.0
    %751 = vmatprep.subr.mxu0 0.0
    %752 = vmatpush1.msra.mxu0 0.0
    %753 = vmatprep.subr.mxu0 0.0
    %754 = vmatpush1.msra.mxu0 0.0
    %755 = vmatprep.subr.mxu0 0.0
    %756 = vmatpush1.msra.mxu0 0.0
    %757 = vmatprep.subr.mxu0 0.0
    %758 = vmatpush1.msra.mxu0 0.0
    %759 = vmatprep.subr.mxu0 0.0
    %760 = vmatpush1.msra.mxu0 0.0
    %761 = vmatprep.subr.mxu0 0.0
    %762 = vmatpush1.msra.mxu0 0.0
    %763 = vmatprep.subr.mxu0 0.0
    %764 = vmatpush1.msra.mxu0 0.0
    %765 = vmatprep.subr.mxu0 0.0
    %766 = vmatpush1.msra.mxu0 0.0
    %767 = vmatprep.subr.mxu0 0.0
    %768 = vmatpush1.msra.mxu0 0.0
    %769 = vmatprep.subr.mxu0 0.0
    %770 = vmatpush1.msra.mxu0 0.0
    %771 = vmatprep.subr.mxu0 0.0
    %772 = vmatpush1.msra.mxu0 0.0
    %773 = vmatprep.subr.mxu0 0.0
    %774 = vmatpush1.msra.mxu0 0.0
    %775 = vmatprep.subr.mxu0 0.0
    %776 = vmatpush1.msra.mxu0 0.0
    %777 = vmatprep.subr.mxu0 0.0
    %778 = vmatpush1.msra.mxu0 0.0
    %779 = vmatprep.subr.mxu0 0.0
    %780 = vmatpush1.msra.mxu0 0.0
    %781 = vmatprep.subr.mxu0 0.0
    %782 = vmatpush1.msra.mxu0 0.0
    %783 = vmatprep.subr.mxu0 0.0
    %784 = vmatpush1.msra.mxu0 0.0
    %785 = vmatprep.subr.mxu0 0.0
    %786 = vmatpush1.msra.mxu0 0.0
    %787 = vmatprep.subr.mxu0 0.0
    %788 = vmatpush1.msra.mxu0 0.0
    %789 = vmatprep.subr.mxu0 0.0
    %790 = vmatpush1.msra.mxu0 0.0
    %791 = vmatprep.subr.mxu0 0.0
    %792 = vmatpush1.msra.mxu0 0.0
    %793 = vmatprep.subr.mxu0 0.0
    %794 = vmatpush1.msra.mxu0 0.0
    %795 = vmatprep.mubr.f32.mxu0 0.0
    %796 = vmatmul.mubr.f32.gmra.mrb[0].mxu0 %v134
    %v797 = vpop.f32.mrb[0].mxu0
    %v798 = vadd.f32 %v131, %v797
    %v799 = vpop.f32.mrb[0].mxu0
    %800 = vmatprep.mubr.f32.mxu0 0.0
    %801 = vmatmul.mubr.f32.gmra.mrb[0].mxu0 %v137
    %v802 = vpop.f32.mrb[0].mxu0
    %v803 = vadd.f32 %v131, %v802
    %v804 = vpop.f32.mrb[0].mxu0
    %805 = vdwg.mxu0
    %806 = vmatprep.subr.mxu0 0.0
    %807 = vmatpush1.msra.mxu0 %v36
    %808 = vmatprep.subr.mxu0 0.0
    %809 = vmatpush1.msra.mxu0 %v37
    %810 = vmatprep.subr.mxu0 0.0
    %811 = vmatpush1.msra.mxu0 %v38
    %812 = vmatprep.subr.mxu0 0.0
    %813 = vmatpush1.msra.mxu0 %v39
    %814 = vmatprep.subr.mxu0 0.0
    %815 = vmatpush1.msra.mxu0 0.0
    %816 = vmatprep.subr.mxu0 0.0
    %817 = vmatpush1.msra.mxu0 0.0
    %818 = vmatprep.subr.mxu0 0.0
    %819 = vmatpush1.msra.mxu0 0.0
    %820 = vmatprep.subr.mxu0 0.0
    %821 = vmatpush1.msra.mxu0 0.0
    %822 = vmatprep.subr.mxu0 0.0
    %823 = vmatpush1.msra.mxu0 0.0
    %824 = vmatprep.subr.mxu0 0.0
    %825 = vmatpush1.msra.mxu0 0.0
    %826 = vmatprep.subr.mxu0 0.0
    %827 = vmatpush1.msra.mxu0 0.0
    %828 = vmatprep.subr.mxu0 0.0
    %829 = vmatpush1.msra.mxu0 0.0
    %830 = vmatprep.subr.mxu0 0.0
    %831 = vmatpush1.msra.mxu0 0.0
    %832 = vmatprep.subr.mxu0 0.0
    %833 = vmatpush1.msra.mxu0 0.0
    %834 = vmatprep.subr.mxu0 0.0
    %835 = vmatpush1.msra.mxu0 0.0
    %836 = vmatprep.subr.mxu0 0.0
    %837 = vmatpush1.msra.mxu0 0.0
    %838 = vmatprep.subr.mxu0 0.0
    %839 = vmatpush1.msra.mxu0 0.0
    %840 = vmatprep.subr.mxu0 0.0
    %841 = vmatpush1.msra.mxu0 0.0
    %842 = vmatprep.subr.mxu0 0.0
    %843 = vmatpush1.msra.mxu0 0.0
    %844 = vmatprep.subr.mxu0 0.0
    %845 = vmatpush1.msra.mxu0 0.0
    %846 = vmatprep.subr.mxu0 0.0
    %847 = vmatpush1.msra.mxu0 0.0
    %848 = vmatprep.subr.mxu0 0.0
    %849 = vmatpush1.msra.mxu0 0.0
    %850 = vmatprep.subr.mxu0 0.0
    %851 = vmatpush1.msra.mxu0 0.0
    %852 = vmatprep.subr.mxu0 0.0
    %853 = vmatpush1.msra.mxu0 0.0
    %854 = vmatprep.subr.mxu0 0.0
    %855 = vmatpush1.msra.mxu0 0.0
    %856 = vmatprep.subr.mxu0 0.0
    %857 = vmatpush1.msra.mxu0 0.0
    %858 = vmatprep.subr.mxu0 0.0
    %859 = vmatpush1.msra.mxu0 0.0
    %860 = vmatprep.subr.mxu0 0.0
    %861 = vmatpush1.msra.mxu0 0.0
    %862 = vmatprep.subr.mxu0 0.0
    %863 = vmatpush1.msra.mxu0 0.0
    %864 = vmatprep.subr.mxu0 0.0
    %865 = vmatpush1.msra.mxu0 0.0
    %866 = vmatprep.subr.mxu0 0.0
    %867 = vmatpush1.msra.mxu0 0.0
    %868 = vmatprep.subr.mxu0 0.0
    %869 = vmatpush1.msra.mxu0 0.0
    %870 = vmatprep.mubr.f32.mxu0 0.0
    %871 = vmatmul.mubr.f32.gmra.mrb[0].mxu0 %v652
    %v872 = vpop.f32.mrb[0].mxu0
    %v873 = vadd.f32 %v217, %v872
    %v874 = vpop.f32.mrb[0].mxu0
    %875 = vmatprep.mubr.f32.mxu0 0.0
    %876 = vmatmul.mubr.f32.gmra.mrb[0].mxu0 %v654
    %v877 = vpop.f32.mrb[0].mxu0
    %v878 = vadd.f32 %v217, %v877
    %v879 = vpop.f32.mrb[0].mxu0
    %880 = vdwg.mxu0
    %v881 = vadd.f32 %v798, %v873
    %v882 = vadd.f32 %v803, %v878
    %v883 = vxor.u32 %v881, 2147483648
    %v884 = vxor.u32 %v882, 2147483648
    %v885 = vmul.f32 %v883, 1.442695
    %v886 = vpow.pop %v885
    %v887 = vmul.f32 %v884, 1.442695
    %v888 = vpow.pop %v887
    %v889 = vadd.f32 %v886, 1.0
    %v890 = vadd.f32 %v888, 1.0
    %v891 = vrcp.pop %v889
    %v892 = vmul.f32 1.0, %v891
    %v893 = vrcp.pop %v890
    %v894 = vmul.f32 1.0, %v893
    %897 = vrot.lane.b32.xlu0 %v873, 64
    %v898 = vpop.permute.xlu0 %897
    %899 = vrot.lane.b32.xlu0 %v878, 64
    %v900 = vpop.permute.xlu0 %899
    %v903 = vmul.f32 %v892, %v898
    %v904 = vmul.f32 %v894, %v900
    %907 = vrot.lane.b32.xlu0 %v903, 64
    %v908 = vpop.permute.xlu0 %907
    %909 = vrot.lane.b32.xlu0 %v904, 64
    %v910 = vpop.permute.xlu0 %909
    %v913 = vadd.f32 %v798, %v908
    %v914 = vadd.f32 %v803, %v910
    %v915 = vtanh.pop %v913
    %v916 = vtanh.pop %v914
    %v917 = vsub.f32 1.0, %v892
    %v918 = vsub.f32 1.0, %v894
    %921 = vrot.lane.b32.xlu0 %v915, 96
    %v922 = vpop.permute.xlu0 %921
    %923 = vrot.lane.b32.xlu0 %v916, 96
    %v924 = vpop.permute.xlu0 %923
    %v927 = vmul.f32 %v917, %v922
    %v928 = vmul.f32 %v918, %v924
    %v929 = vmul.f32 %v892, %v640
    %v930 = vmul.f32 %v894, %v641
    %v931 = vadd.f32 %v927, %v929
    %v932 = vadd.f32 %v928, %v930
    %933 = vst [vmem:[#allocation2] sm:$0xff] 0.0
    %934 = vst [vmem:[#allocation2 + $0x8] sm:$0xff] 0.0
    %935 = vst [vmem:[#allocation2 + $0x10] sm:$0xff] 0.0
    %936 = vst [vmem:[#allocation2 + $0x18] sm:$0xff] 0.0
    %939 = vrot.lane.b32.xlu0 %v931, 97
    %v940 = vpop.permute.xlu0 %939
    %941 = vrot.lane.b32.xlu0 %v932, 97
    %v942 = vpop.permute.xlu0 %941
    %vm945 = vcmask 269320
    %946 = vst.msk [vmem:[#allocation2] sm:$0xff] %vm945, %v940
    %947 = vst.msk [vmem:[#allocation2 + $0x8] sm:$0xff] %vm945, %v942
    %948 = vrot.lane.b32.xlu0 %v32, 33
    %v949 = vpop.permute.xlu0 %948
    %950 = vrot.lane.b32.xlu0 %v33, 33
    %v951 = vpop.permute.xlu0 %950
    %vm954 = vcmask 400648
    %955 = vst.msk [vmem:[#allocation2] sm:$0xff] %vm954, %v949
    %956 = vst.msk [vmem:[#allocation2 + $0x8] sm:$0xff] %vm954, %v951
    %957 = vst.msk [vmem:[#allocation2 + $0x10] sm:$0xff] %vm945, %v940
    %958 = vst.msk [vmem:[#allocation2 + $0x18] sm:$0xff] %vm945, %v942
    %v959 = vld [vmem:[#allocation2] sm:$0xff]
    %v960 = vld [vmem:[#allocation2 + $0x8] sm:$0xff]
    %v961 = vld [vmem:[#allocation2 + $0x10] sm:$0xff]
    %v962 = vld [vmem:[#allocation2 + $0x18] sm:$0xff]
    %967 = vrot.lane.b32.xlu0 %v959, 127
    %v968 = vpop.permute.xlu0 %967
    %969 = vrot.lane.b32.xlu0 %v960, 127
    %v970 = vpop.permute.xlu0 %969
    %971 = vrot.lane.b32.xlu0 %v961, 127
    %v972 = vpop.permute.xlu0 %971
    %973 = vrot.lane.b32.xlu0 %v962, 127
    %v974 = vpop.permute.xlu0 %973
    %979 = vrot.lane.b32.xlu0 %v959, 126
    %v980 = vpop.permute.xlu0 %979
    %981 = vrot.lane.b32.xlu0 %v960, 126
    %v982 = vpop.permute.xlu0 %981
    %983 = vrot.lane.b32.xlu0 %v961, 126
    %v984 = vpop.permute.xlu0 %983
    %985 = vrot.lane.b32.xlu0 %v962, 126
    %v986 = vpop.permute.xlu0 %985
    %v991 = vld [vmem:[#allocation3 + $0x90] sm:$0xff]
    %v992 = vld [vmem:[#allocation3 + $0x98] sm:$0xff]
    %v993 = vld [vmem:[#allocation3 + $0xa0] sm:$0xff]
    %v994 = vld [vmem:[#allocation3 + $0xa8] sm:$0xff]
    %v995 = vld [vmem:[#allocation3 + $0xb0] sm:$0xff]
    %v996 = vld [vmem:[#allocation3 + $0xb8] sm:$0xff]
    %v997 = vld [vmem:[#allocation3 + $0xc0] sm:$0xff]
    %v998 = vld [vmem:[#allocation3 + $0xc8] sm:$0xff]
    %1000 = vset.pattern.permute.xlu0 0
    %1001 = vperm.xlu0 %1000, %v995
    %v1002 = vpop.permute.xlu0 %1001
    %1005 = vset.pattern.permute.xlu0 0
    %1006 = vperm.xlu0 %1005, %v996
    %v1007 = vpop.permute.xlu0 %1006
    %1010 = vset.pattern.permute.xlu0 0
    %1011 = vperm.xlu0 %1010, %v997
    %v1012 = vpop.permute.xlu0 %1011
    %1015 = vset.pattern.permute.xlu0 0
    %1016 = vperm.xlu0 %1015, %v998
    %v1017 = vpop.permute.xlu0 %1016
    %vm1019 = vcmask 785408
    %v1021 = vsel %vm1019, %v991, 0
    %v1024 = vsel %vm1019, %v992, 0
    %v1027 = vsel %vm1019, %v993, 0
    %v1030 = vsel %vm1019, %v994, 0
    %1032 = vmatprep.subr.mxu0 0.0
    %1033 = vmatpush1.msra.mxu0 %v959
    %1034 = vmatprep.subr.mxu0 0.0
    %1035 = vmatpush1.msra.mxu0 %v960
    %1036 = vmatprep.subr.mxu0 0.0
    %1037 = vmatpush1.msra.mxu0 %v961
    %1038 = vmatprep.subr.mxu0 0.0
    %1039 = vmatpush1.msra.mxu0 %v962
    %1040 = vmatprep.subr.mxu0 0.0
    %1041 = vmatpush1.msra.mxu0 %v968
    %1042 = vmatprep.subr.mxu0 0.0
    %1043 = vmatpush1.msra.mxu0 %v970
    %1044 = vmatprep.subr.mxu0 0.0
    %1045 = vmatpush1.msra.mxu0 %v972
    %1046 = vmatprep.subr.mxu0 0.0
    %1047 = vmatpush1.msra.mxu0 %v974
    %1048 = vmatprep.subr.mxu0 0.0
    %1049 = vmatpush1.msra.mxu0 %v980
    %1050 = vmatprep.subr.mxu0 0.0
    %1051 = vmatpush1.msra.mxu0 %v982
    %1052 = vmatprep.subr.mxu0 0.0
    %1053 = vmatpush1.msra.mxu0 %v984
    %1054 = vmatprep.subr.mxu0 0.0
    %1055 = vmatpush1.msra.mxu0 %v986
    %1056 = vmatprep.subr.mxu0 0.0
    %1057 = vmatpush1.msra.mxu0 0.0
    %1058 = vmatprep.subr.mxu0 0.0
    %1059 = vmatpush1.msra.mxu0 0.0
    %1060 = vmatprep.subr.mxu0 0.0
    %1061 = vmatpush1.msra.mxu0 0.0
    %1062 = vmatprep.subr.mxu0 0.0
    %1063 = vmatpush1.msra.mxu0 0.0
    %1064 = vmatprep.subr.mxu0 0.0
    %1065 = vmatpush1.msra.mxu0 0.0
    %1066 = vmatprep.subr.mxu0 0.0
    %1067 = vmatpush1.msra.mxu0 0.0
    %1068 = vmatprep.subr.mxu0 0.0
    %1069 = vmatpush1.msra.mxu0 0.0
    %1070 = vmatprep.subr.mxu0 0.0
    %1071 = vmatpush1.msra.mxu0 0.0
    %1072 = vmatprep.subr.mxu0 0.0
    %1073 = vmatpush1.msra.mxu0 0.0
    %1074 = vmatprep.subr.mxu0 0.0
    %1075 = vmatpush1.msra.mxu0 0.0
    %1076 = vmatprep.subr.mxu0 0.0
    %1077 = vmatpush1.msra.mxu0 0.0
    %1078 = vmatprep.subr.mxu0 0.0
    %1079 = vmatpush1.msra.mxu0 0.0
    %1080 = vmatprep.subr.mxu0 0.0
    %1081 = vmatpush1.msra.mxu0 0.0
    %1082 = vmatprep.subr.mxu0 0.0
    %1083 = vmatpush1.msra.mxu0 0.0
    %1084 = vmatprep.subr.mxu0 0.0
    %1085 = vmatpush1.msra.mxu0 0.0
    %1086 = vmatprep.subr.mxu0 0.0
    %1087 = vmatpush1.msra.mxu0 0.0
    %1088 = vmatprep.subr.mxu0 0.0
    %1089 = vmatpush1.msra.mxu0 0.0
    %1090 = vmatprep.subr.mxu0 0.0
    %1091 = vmatpush1.msra.mxu0 0.0
    %1092 = vmatprep.subr.mxu0 0.0
    %1093 = vmatpush1.msra.mxu0 0.0
    %1094 = vmatprep.subr.mxu0 0.0
    %1095 = vmatpush1.msra.mxu0 0.0
    %1096 = vmatprep.mubr.f32.mxu0 0.0
    %1097 = vmatmul.mubr.f32.gmra.mrb[0].mxu0 %v1021
    %v1098 = vpop.f32.mrb[0].mxu0
    %v1099 = vadd.f32 %v1002, %v1098
    %v1100 = vpop.f32.mrb[0].mxu0
    %1101 = vmatprep.mubr.f32.mxu0 0.0
    %1102 = vmatmul.mubr.f32.gmra.mrb[0].mxu0 %v1024
    %v1103 = vpop.f32.mrb[0].mxu0
    %v1104 = vadd.f32 %v1007, %v1103
    %v1105 = vpop.f32.mrb[0].mxu0
    %1106 = vmatprep.mubr.f32.mxu0 0.0
    %1107 = vmatmul.mubr.f32.gmra.mrb[0].mxu0 %v1027
    %v1108 = vpop.f32.mrb[0].mxu0
    %v1109 = vadd.f32 %v1012, %v1108
    %v1110 = vpop.f32.mrb[0].mxu0
    %1111 = vmatprep.mubr.f32.mxu0 0.0
    %1112 = vmatmul.mubr.f32.gmra.mrb[0].mxu0 %v1030
    %v1113 = vpop.f32.mrb[0].mxu0
    %v1114 = vadd.f32 %v1017, %v1113
    %v1115 = vpop.f32.mrb[0].mxu0
    %1116 = vdwg.mxu0
    %v1117 = vmax.f32 %v1099, 0.0
    %v1118 = vmax.f32 %v1104, 0.0
    %v1119 = vmax.f32 %v1109, 0.0
    %v1120 = vmax.f32 %v1114, 0.0
    %1125 = vrot.lane.b32.xlu0 %v1117, 127
    %v1126 = vpop.permute.xlu0 %1125
    %1127 = vrot.lane.b32.xlu0 %v1118, 127
    %v1128 = vpop.permute.xlu0 %1127
    %1129 = vrot.lane.b32.xlu0 %v1119, 127
    %v1130 = vpop.permute.xlu0 %1129
    %1131 = vrot.lane.b32.xlu0 %v1120, 127
    %v1132 = vpop.permute.xlu0 %1131
    %v1137 = vmax.f32 %v1117, %v1126
    %v1138 = vmax.f32 %v1118, %v1128
    %v1139 = vmax.f32 %v1119, %v1130
    %v1140 = vmax.f32 %v1120, %v1132
    %1141 = vrot.lane.b32.xlu0 %v1117, 126
    %v1142 = vpop.permute.xlu0 %1141
    %1143 = vrot.lane.b32.xlu0 %v1118, 126
    %v1144 = vpop.permute.xlu0 %1143
    %1145 = vrot.lane.b32.xlu0 %v1119, 126
    %v1146 = vpop.permute.xlu0 %1145
    %1147 = vrot.lane.b32.xlu0 %v1120, 126
    %v1148 = vpop.permute.xlu0 %1147
    %v1153 = vmax.f32 %v1137, %v1142
    %v1154 = vmax.f32 %v1138, %v1144
    %v1155 = vmax.f32 %v1139, %v1146
    %v1156 = vmax.f32 %v1140, %v1148
    %v1157 = vld [vmem:[#allocation3 + $0xf0] sm:$0xff]
    %v1158 = vld [vmem:[#allocation3 + $0xf8] sm:$0xff]
    %v1159 = vld [vmem:[#allocation3 + $0x100] sm:$0xff]
    %v1160 = vld [vmem:[#allocation3 + $0x108] sm:$0xff]
    %v1161 = vld [vmem:[#allocation3 + $0x110] sm:$0xff]
    %v1162 = vld [vmem:[#allocation3 + $0x118] sm:$0x3f]
    %vm1163 = vcmask 375808
    %v1165 = vsel %vm1163, %v1153, 0
    %v1168 = vsel %vm1163, %v1154, 0
    %v1171 = vsel %vm1163, %v1155, 0
    %v1174 = vsel %vm1163, %v1156, 0
    %vm1176 = vcmask 1045504
    %v1178 = vsel %vm1176, %v1162, 0
    %1180 = vmatprep.subr.mxu0 0.0
    %1181 = vmatpush1.msra.mxu0 %v1157
    %1182 = vmatprep.subr.mxu0 0.0
    %1183 = vmatpush1.msra.mxu0 %v1158
    %1184 = vmatprep.subr.mxu0 0.0
    %1185 = vmatpush1.msra.mxu0 %v1159
    %1186 = vmatprep.subr.mxu0 0.0
    %1187 = vmatpush1.msra.mxu0 %v1160
    %1188 = vmatprep.subr.mxu0 0.0
    %1189 = vmatpush1.msra.mxu0 %v1161
    %1190 = vmatprep.subr.mxu0 0.0
    %1191 = vmatpush1.msra.mxu0 %v1178
    %1192 = vmatprep.subr.mxu0 0.0
    %1193 = vmatpush1.msra.mxu0 0.0
    %1194 = vmatprep.subr.mxu0 0.0
    %1195 = vmatpush1.msra.mxu0 0.0
    %1196 = vmatprep.subr.mxu0 0.0
    %1197 = vmatpush1.msra.mxu0 0.0
    %1198 = vmatprep.subr.mxu0 0.0
    %1199 = vmatpush1.msra.mxu0 0.0
    %1200 = vmatprep.subr.mxu0 0.0
    %1201 = vmatpush1.msra.mxu0 0.0
    %1202 = vmatprep.subr.mxu0 0.0
    %1203 = vmatpush1.msra.mxu0 0.0
    %1204 = vmatprep.subr.mxu0 0.0
    %1205 = vmatpush1.msra.mxu0 0.0
    %1206 = vmatprep.subr.mxu0 0.0
    %1207 = vmatpush1.msra.mxu0 0.0
    %1208 = vmatprep.subr.mxu0 0.0
    %1209 = vmatpush1.msra.mxu0 0.0
    %1210 = vmatprep.subr.mxu0 0.0
    %1211 = vmatpush1.msra.mxu0 0.0
    %1212 = vmatprep.subr.mxu0 0.0
    %1213 = vmatpush1.msra.mxu0 0.0
    %1214 = vmatprep.subr.mxu0 0.0
    %1215 = vmatpush1.msra.mxu0 0.0
    %1216 = vmatprep.subr.mxu0 0.0
    %1217 = vmatpush1.msra.mxu0 0.0
    %1218 = vmatprep.subr.mxu0 0.0
    %1219 = vmatpush1.msra.mxu0 0.0
    %1220 = vmatprep.subr.mxu0 0.0
    %1221 = vmatpush1.msra.mxu0 0.0
    %1222 = vmatprep.subr.mxu0 0.0
    %1223 = vmatpush1.msra.mxu0 0.0
    %1224 = vmatprep.subr.mxu0 0.0
    %1225 = vmatpush1.msra.mxu0 0.0
    %1226 = vmatprep.subr.mxu0 0.0
    %1227 = vmatpush1.msra.mxu0 0.0
    %1228 = vmatprep.subr.mxu0 0.0
    %1229 = vmatpush1.msra.mxu0 0.0
    %1230 = vmatprep.subr.mxu0 0.0
    %1231 = vmatpush1.msra.mxu0 0.0
    %1232 = vmatprep.subr.mxu0 0.0
    %1233 = vmatpush1.msra.mxu0 0.0
    %1234 = vmatprep.subr.mxu0 0.0
    %1235 = vmatpush1.msra.mxu0 0.0
    %1236 = vmatprep.subr.mxu0 0.0
    %1237 = vmatpush1.msra.mxu0 0.0
    %1238 = vmatprep.subr.mxu0 0.0
    %1239 = vmatpush1.msra.mxu0 0.0
    %1240 = vmatprep.subr.mxu0 0.0
    %1241 = vmatpush1.msra.mxu0 0.0
    %1242 = vmatprep.subr.mxu0 0.0
    %1243 = vmatpush1.msra.mxu0 0.0
    %1244 = vmatprep.mubr.f32.mxu0 0.0
    %1245 = vmatmul.mubr.f32.gmra.mrb[0].mxu0 %v1165
    %v1246 = vpop.f32.mrb[0].mxu0
    %v1247 = vadd.f32 0.0, %v1246
    %v1248 = vpop.f32.mrb[0].mxu0
    %1249 = vmatprep.mubr.f32.mxu0 0.0
    %1250 = vmatmul.mubr.f32.gmra.mrb[0].mxu0 %v1168
    %v1251 = vpop.f32.mrb[0].mxu0
    %v1252 = vadd.f32 0.0, %v1251
    %v1253 = vpop.f32.mrb[0].mxu0
    %1254 = vmatprep.mubr.f32.mxu0 0.0
    %1255 = vmatmul.mubr.f32.gmra.mrb[0].mxu0 %v1171
    %v1256 = vpop.f32.mrb[0].mxu0
    %v1257 = vadd.f32 0.0, %v1256
    %v1258 = vpop.f32.mrb[0].mxu0
    %1259 = vmatprep.mubr.f32.mxu0 0.0
    %1260 = vmatmul.mubr.f32.gmra.mrb[0].mxu0 %v1174
    %v1261 = vpop.f32.mrb[0].mxu0
    %v1262 = vadd.f32 0.0, %v1261
    %v1263 = vpop.f32.mrb[0].mxu0
    %1264 = vdwg.mxu0
    %v1265 = vld [vmem:[#allocation3 + $0xd0] sm:$0xff]
    %v1266 = vld [vmem:[#allocation3 + $0xd8] sm:$0xff]
    %v1267 = vld [vmem:[#allocation3 + $0xe0] sm:$0xff]
    %v1268 = vld [vmem:[#allocation3 + $0xe8] sm:$0xff]
    %1270 = vset.pattern.permute.xlu0 0
    %1271 = vperm.xlu0 %1270, %v1267
    %v1272 = vpop.permute.xlu0 %1271
    %1275 = vset.pattern.permute.xlu0 0
    %1276 = vperm.xlu0 %1275, %v1268
    %v1277 = vpop.permute.xlu0 %1276
    %v1280 = vsel %vm46, %v1265, 0
    %v1283 = vsel %vm46, %v1266, 0
    %1285 = vmatprep.subr.mxu0 0.0
    %1286 = vmatpush1.msra.mxu0 %v1247
    %1287 = vmatprep.subr.mxu0 0.0
    %1288 = vmatpush1.msra.mxu0 %v1252
    %1289 = vmatprep.subr.mxu0 0.0
    %1290 = vmatpush1.msra.mxu0 %v1257
    %1291 = vmatprep.subr.mxu0 0.0
    %1292 = vmatpush1.msra.mxu0 %v1262
    %1293 = vmatprep.subr.mxu0 0.0
    %1294 = vmatpush1.msra.mxu0 0.0
    %1295 = vmatprep.subr.mxu0 0.0
    %1296 = vmatpush1.msra.mxu0 0.0
    %1297 = vmatprep.subr.mxu0 0.0
    %1298 = vmatpush1.msra.mxu0 0.0
    %1299 = vmatprep.subr.mxu0 0.0
    %1300 = vmatpush1.msra.mxu0 0.0
    %1301 = vmatprep.subr.mxu0 0.0
    %1302 = vmatpush1.msra.mxu0 0.0
    %1303 = vmatprep.subr.mxu0 0.0
    %1304 = vmatpush1.msra.mxu0 0.0
    %1305 = vmatprep.subr.mxu0 0.0
    %1306 = vmatpush1.msra.mxu0 0.0
    %1307 = vmatprep.subr.mxu0 0.0
    %1308 = vmatpush1.msra.mxu0 0.0
    %1309 = vmatprep.subr.mxu0 0.0
    %1310 = vmatpush1.msra.mxu0 0.0
    %1311 = vmatprep.subr.mxu0 0.0
    %1312 = vmatpush1.msra.mxu0 0.0
    %1313 = vmatprep.subr.mxu0 0.0
    %1314 = vmatpush1.msra.mxu0 0.0
    %1315 = vmatprep.subr.mxu0 0.0
    %1316 = vmatpush1.msra.mxu0 0.0
    %1317 = vmatprep.subr.mxu0 0.0
    %1318 = vmatpush1.msra.mxu0 0.0
    %1319 = vmatprep.subr.mxu0 0.0
    %1320 = vmatpush1.msra.mxu0 0.0
    %1321 = vmatprep.subr.mxu0 0.0
    %1322 = vmatpush1.msra.mxu0 0.0
    %1323 = vmatprep.subr.mxu0 0.0
    %1324 = vmatpush1.msra.mxu0 0.0
    %1325 = vmatprep.subr.mxu0 0.0
    %1326 = vmatpush1.msra.mxu0 0.0
    %1327 = vmatprep.subr.mxu0 0.0
    %1328 = vmatpush1.msra.mxu0 0.0
    %1329 = vmatprep.subr.mxu0 0.0
    %1330 = vmatpush1.msra.mxu0 0.0
    %1331 = vmatprep.subr.mxu0 0.0
    %1332 = vmatpush1.msra.mxu0 0.0
    %1333 = vmatprep.subr.mxu0 0.0
    %1334 = vmatpush1.msra.mxu0 0.0
    %1335 = vmatprep.subr.mxu0 0.0
    %1336 = vmatpush1.msra.mxu0 0.0
    %1337 = vmatprep.subr.mxu0 0.0
    %1338 = vmatpush1.msra.mxu0 0.0
    %1339 = vmatprep.subr.mxu0 0.0
    %1340 = vmatpush1.msra.mxu0 0.0
    %1341 = vmatprep.subr.mxu0 0.0
    %1342 = vmatpush1.msra.mxu0 0.0
    %1343 = vmatprep.subr.mxu0 0.0
    %1344 = vmatpush1.msra.mxu0 0.0
    %1345 = vmatprep.subr.mxu0 0.0
    %1346 = vmatpush1.msra.mxu0 0.0
    %1347 = vmatprep.subr.mxu0 0.0
    %1348 = vmatpush1.msra.mxu0 0.0
    %1349 = vmatprep.mubr.f32.mxu0 0.0
    %1350 = vmatmul.mubr.f32.gmra.mrb[0].mxu0 %v1280
    %v1351 = vpop.f32.mrb[0].mxu0
    %v1352 = vadd.f32 %v1272, %v1351
    %v1353 = vpop.f32.mrb[0].mxu0
    %1354 = vmatprep.mubr.f32.mxu0 0.0
    %1355 = vmatmul.mubr.f32.gmra.mrb[0].mxu0 %v1283
    %v1356 = vpop.f32.mrb[0].mxu0
    %v1357 = vadd.f32 %v1277, %v1356
    %v1358 = vpop.f32.mrb[0].mxu0
    %1359 = vdwg.mxu0
    %v1360 = vmax.f32 %v1352, 0.0
    %v1361 = vmax.f32 %v1357, 0.0
    %1364 = vrot.lane.b32.xlu0 %v1360, 127
    %v1365 = vpop.permute.xlu0 %1364
    %1366 = vrot.lane.b32.xlu0 %v1361, 127
    %v1367 = vpop.permute.xlu0 %1366
    %v1370 = vmax.f32 %v1360, %v1365
    %v1371 = vmax.f32 %v1361, %v1367
    %v1372 = vld [vmem:[#allocation3 + $0x120] sm:$0xff]
    %v1373 = vld [vmem:[#allocation3 + $0x128] sm:$0xff]
    %v1374 = vld [vmem:[#allocation3 + $0x130] sm:$0x3f]
    %vm1375 = vcmask 179200
    %v1377 = vsel %vm1375, %v1370, 0
    %v1380 = vsel %vm1375, %v1371, 0
    %v1383 = vsel %vm1176, %v1374, 0
    %1385 = vmatprep.subr.mxu0 0.0
    %1386 = vmatpush1.msra.mxu0 %v1372
    %1387 = vmatprep.subr.mxu0 0.0
    %1388 = vmatpush1.msra.mxu0 %v1373
    %1389 = vmatprep.subr.mxu0 0.0
    %1390 = vmatpush1.msra.mxu0 %v1383
    %1391 = vmatprep.subr.mxu0 0.0
    %1392 = vmatpush1.msra.mxu0 0.0
    %1393 = vmatprep.subr.mxu0 0.0
    %1394 = vmatpush1.msra.mxu0 0.0
    %1395 = vmatprep.subr.mxu0 0.0
    %1396 = vmatpush1.msra.mxu0 0.0
    %1397 = vmatprep.subr.mxu0 0.0
    %1398 = vmatpush1.msra.mxu0 0.0
    %1399 = vmatprep.subr.mxu0 0.0
    %1400 = vmatpush1.msra.mxu0 0.0
    %1401 = vmatprep.subr.mxu0 0.0
    %1402 = vmatpush1.msra.mxu0 0.0
    %1403 = vmatprep.subr.mxu0 0.0
    %1404 = vmatpush1.msra.mxu0 0.0
    %1405 = vmatprep.subr.mxu0 0.0
    %1406 = vmatpush1.msra.mxu0 0.0
    %1407 = vmatprep.subr.mxu0 0.0
    %1408 = vmatpush1.msra.mxu0 0.0
    %1409 = vmatprep.subr.mxu0 0.0
    %1410 = vmatpush1.msra.mxu0 0.0
    %1411 = vmatprep.subr.mxu0 0.0
    %1412 = vmatpush1.msra.mxu0 0.0
    %1413 = vmatprep.subr.mxu0 0.0
    %1414 = vmatpush1.msra.mxu0 0.0
    %1415 = vmatprep.subr.mxu0 0.0
    %1416 = vmatpush1.msra.mxu0 0.0
    %1417 = vmatprep.subr.mxu0 0.0
    %1418 = vmatpush1.msra.mxu0 0.0
    %1419 = vmatprep.subr.mxu0 0.0
    %1420 = vmatpush1.msra.mxu0 0.0
    %1421 = vmatprep.subr.mxu0 0.0
    %1422 = vmatpush1.msra.mxu0 0.0
    %1423 = vmatprep.subr.mxu0 0.0
    %1424 = vmatpush1.msra.mxu0 0.0
    %1425 = vmatprep.subr.mxu0 0.0
    %1426 = vmatpush1.msra.mxu0 0.0
    %1427 = vmatprep.subr.mxu0 0.0
    %1428 = vmatpush1.msra.mxu0 0.0
    %1429 = vmatprep.subr.mxu0 0.0
    %1430 = vmatpush1.msra.mxu0 0.0
    %1431 = vmatprep.subr.mxu0 0.0
    %1432 = vmatpush1.msra.mxu0 0.0
    %1433 = vmatprep.subr.mxu0 0.0
    %1434 = vmatpush1.msra.mxu0 0.0
    %1435 = vmatprep.subr.mxu0 0.0
    %1436 = vmatpush1.msra.mxu0 0.0
    %1437 = vmatprep.subr.mxu0 0.0
    %1438 = vmatpush1.msra.mxu0 0.0
    %1439 = vmatprep.subr.mxu0 0.0
    %1440 = vmatpush1.msra.mxu0 0.0
    %1441 = vmatprep.subr.mxu0 0.0
    %1442 = vmatpush1.msra.mxu0 0.0
    %1443 = vmatprep.subr.mxu0 0.0
    %1444 = vmatpush1.msra.mxu0 0.0
    %1445 = vmatprep.subr.mxu0 0.0
    %1446 = vmatpush1.msra.mxu0 0.0
    %1447 = vmatprep.subr.mxu0 0.0
    %1448 = vmatpush1.msra.mxu0 0.0
    %1449 = vmatprep.mubr.f32.mxu0 0.0
    %1450 = vmatmul.mubr.f32.gmra.mrb[0].mxu0 %v1377
    %v1451 = vpop.f32.mrb[0].mxu0
    %v1452 = vadd.f32 0.0, %v1451
    %v1453 = vpop.f32.mrb[0].mxu0
    %1454 = vmatprep.mubr.f32.mxu0 0.0
    %1455 = vmatmul.mubr.f32.gmra.mrb[0].mxu0 %v1380
    %v1456 = vpop.f32.mrb[0].mxu0
    %v1457 = vadd.f32 0.0, %v1456
    %v1458 = vpop.f32.mrb[0].mxu0
    %1459 = vdwg.mxu0
    %v1460 = vld [vmem:[#allocation3 + $0x138] sm:$0xff]
    %v1461 = vld [vmem:[#allocation3 + $0x140] sm:$0xff]
    %v1462 = vld [vmem:[#allocation3 + $0x148] sm:$0xf]
    %v1463 = vld [vmem:[#allocation3 + $0x150] sm:$0xf]
    %v1464 = vmul.f32 %v1452, %v1460
    %v1465 = vmul.f32 %v1457, %v1461
    %v1467 = vsel %vm132, %v1462, 0
    %1469 = vmatprep.subr.mxu0 0.0
    %1470 = vmatpush1.msra.mxu0 %v1464
    %1471 = vmatprep.subr.mxu0 0.0
    %1472 = vmatpush1.msra.mxu0 %v1465
    %1473 = vmatprep.subr.mxu0 0.0
    %1474 = vmatpush1.msra.mxu0 0.0
    %1475 = vmatprep.subr.mxu0 0.0
    %1476 = vmatpush1.msra.mxu0 0.0
    %1477 = vmatprep.subr.mxu0 0.0
    %1478 = vmatpush1.msra.mxu0 0.0
    %1479 = vmatprep.subr.mxu0 0.0
    %1480 = vmatpush1.msra.mxu0 0.0
    %1481 = vmatprep.subr.mxu0 0.0
    %1482 = vmatpush1.msra.mxu0 0.0
    %1483 = vmatprep.subr.mxu0 0.0
    %1484 = vmatpush1.msra.mxu0 0.0
    %1485 = vmatprep.subr.mxu0 0.0
    %1486 = vmatpush1.msra.mxu0 0.0
    %1487 = vmatprep.subr.mxu0 0.0
    %1488 = vmatpush1.msra.mxu0 0.0
    %1489 = vmatprep.subr.mxu0 0.0
    %1490 = vmatpush1.msra.mxu0 0.0
    %1491 = vmatprep.subr.mxu0 0.0
    %1492 = vmatpush1.msra.mxu0 0.0
    %1493 = vmatprep.subr.mxu0 0.0
    %1494 = vmatpush1.msra.mxu0 0.0
    %1495 = vmatprep.subr.mxu0 0.0
    %1496 = vmatpush1.msra.mxu0 0.0
    %1497 = vmatprep.subr.mxu0 0.0
    %1498 = vmatpush1.msra.mxu0 0.0
    %1499 = vmatprep.subr.mxu0 0.0
    %1500 = vmatpush1.msra.mxu0 0.0
    %1501 = vmatprep.subr.mxu0 0.0
    %1502 = vmatpush1.msra.mxu0 0.0
    %1503 = vmatprep.subr.mxu0 0.0
    %1504 = vmatpush1.msra.mxu0 0.0
    %1505 = vmatprep.subr.mxu0 0.0
    %1506 = vmatpush1.msra.mxu0 0.0
    %1507 = vmatprep.subr.mxu0 0.0
    %1508 = vmatpush1.msra.mxu0 0.0
    %1509 = vmatprep.subr.mxu0 0.0
    %1510 = vmatpush1.msra.mxu0 0.0
    %1511 = vmatprep.subr.mxu0 0.0
    %1512 = vmatpush1.msra.mxu0 0.0
    %1513 = vmatprep.subr.mxu0 0.0
    %1514 = vmatpush1.msra.mxu0 0.0
    %1515 = vmatprep.subr.mxu0 0.0
    %1516 = vmatpush1.msra.mxu0 0.0
    %1517 = vmatprep.subr.mxu0 0.0
    %1518 = vmatpush1.msra.mxu0 0.0
    %1519 = vmatprep.subr.mxu0 0.0
    %1520 = vmatpush1.msra.mxu0 0.0
    %1521 = vmatprep.subr.mxu0 0.0
    %1522 = vmatpush1.msra.mxu0 0.0
    %1523 = vmatprep.subr.mxu0 0.0
    %1524 = vmatpush1.msra.mxu0 0.0
    %1525 = vmatprep.subr.mxu0 0.0
    %1526 = vmatpush1.msra.mxu0 0.0
    %1527 = vmatprep.subr.mxu0 0.0
    %1528 = vmatpush1.msra.mxu0 0.0
    %1529 = vmatprep.subr.mxu0 0.0
    %1530 = vmatpush1.msra.mxu0 0.0
    %1531 = vmatprep.subr.mxu0 0.0
    %1532 = vmatpush1.msra.mxu0 0.0
    %1533 = vmatprep.mubr.f32.mxu0 0.0
    %1534 = vmatmul.mubr.f32.gmra.mrb[0].mxu0 %v1467
    %v1535 = vpop.f32.mrb[0].mxu0
    %v1536 = vadd.f32 0.0, %v1535
    %v1537 = vpop.f32.mrb[0].mxu0
    %1538 = vdwg.mxu0
    %vm1539 = vcmask 84992
    %v1540 = vsel %vm1539, %v1536, 0.0
    %1541 = vadd.xlane.f32.xlu0 %v1540
    %v1542 = vpop.xlane.xlu0 %1541
    %v1543 = vadd.f32 %v1542, %v1463
    %v1545 = vrot.slane %v1543, 2
    %v1547 = vmul.f32 %v1543, %v1545
    %v1548 = vld [vmem:[#allocation3 + $0x158] sm:$0xff]
    %v1549 = vld [vmem:[#allocation3 + $0x160] sm:$0xff]
    %v1550 = vld [vmem:[#allocation3 + $0x168] sm:$0xff]
    %v1551 = vld [vmem:[#allocation3 + $0x170] sm:$0xff]
    %v1552 = vld [vmem:[#allocation3 + $0x178] sm:$0x1]
    %v1553 = vld [vmem:[%s2] sm:$0x3]
    %v1554 = vlaneseq
    %v1555 = vshrl.u32 %v1554, 7
    %v1556 = vsub.s32 0, %v1555
    %v1557 = vrot.slane %v1552, %v1556
    %v1559 = vsel %vm46, %v1553, 0
    %1561 = vmatprep.subr.mxu0 0.0
    %1562 = vmatpush1.msra.mxu0 %v1548
    %1563 = vmatprep.subr.mxu0 0.0
    %1564 = vmatpush1.msra.mxu0 %v1549
    %1565 = vmatprep.subr.mxu0 0.0
    %1566 = vmatpush1.msra.mxu0 %v1550
    %1567 = vmatprep.subr.mxu0 0.0
    %1568 = vmatpush1.msra.mxu0 %v1551
    %1569 = vmatprep.subr.mxu0 0.0
    %1570 = vmatpush1.msra.mxu0 0.0
    %1571 = vmatprep.subr.mxu0 0.0
    %1572 = vmatpush1.msra.mxu0 0.0
    %1573 = vmatprep.subr.mxu0 0.0
    %1574 = vmatpush1.msra.mxu0 0.0
    %1575 = vmatprep.subr.mxu0 0.0
    %1576 = vmatpush1.msra.mxu0 0.0
    %1577 = vmatprep.subr.mxu0 0.0
    %1578 = vmatpush1.msra.mxu0 0.0
    %1579 = vmatprep.subr.mxu0 0.0
    %1580 = vmatpush1.msra.mxu0 0.0
    %1581 = vmatprep.subr.mxu0 0.0
    %1582 = vmatpush1.msra.mxu0 0.0
    %1583 = vmatprep.subr.mxu0 0.0
    %1584 = vmatpush1.msra.mxu0 0.0
    %1585 = vmatprep.subr.mxu0 0.0
    %1586 = vmatpush1.msra.mxu0 0.0
    %1587 = vmatprep.subr.mxu0 0.0
    %1588 = vmatpush1.msra.mxu0 0.0
    %1589 = vmatprep.subr.mxu0 0.0
    %1590 = vmatpush1.msra.mxu0 0.0
    %1591 = vmatprep.subr.mxu0 0.0
    %1592 = vmatpush1.msra.mxu0 0.0
    %1593 = vmatprep.subr.mxu0 0.0
    %1594 = vmatpush1.msra.mxu0 0.0
    %1595 = vmatprep.subr.mxu0 0.0
    %1596 = vmatpush1.msra.mxu0 0.0
    %1597 = vmatprep.subr.mxu0 0.0
    %1598 = vmatpush1.msra.mxu0 0.0
    %1599 = vmatprep.subr.mxu0 0.0
    %1600 = vmatpush1.msra.mxu0 0.0
    %1601 = vmatprep.subr.mxu0 0.0
    %1602 = vmatpush1.msra.mxu0 0.0
    %1603 = vmatprep.subr.mxu0 0.0
    %1604 = vmatpush1.msra.mxu0 0.0
    %1605 = vmatprep.subr.mxu0 0.0
    %1606 = vmatpush1.msra.mxu0 0.0
    %1607 = vmatprep.subr.mxu0 0.0
    %1608 = vmatpush1.msra.mxu0 0.0
    %1609 = vmatprep.subr.mxu0 0.0
    %1610 = vmatpush1.msra.mxu0 0.0
    %1611 = vmatprep.subr.mxu0 0.0
    %1612 = vmatpush1.msra.mxu0 0.0
    %1613 = vmatprep.subr.mxu0 0.0
    %1614 = vmatpush1.msra.mxu0 0.0
    %1615 = vmatprep.subr.mxu0 0.0
    %1616 = vmatpush1.msra.mxu0 0.0
    %1617 = vmatprep.subr.mxu0 0.0
    %1618 = vmatpush1.msra.mxu0 0.0
    %1619 = vmatprep.subr.mxu0 0.0
    %1620 = vmatpush1.msra.mxu0 0.0
    %1621 = vmatprep.subr.mxu0 0.0
    %1622 = vmatpush1.msra.mxu0 0.0
    %1623 = vmatprep.subr.mxu0 0.0
    %1624 = vmatpush1.msra.mxu0 0.0
    %1625 = vmatprep.mubr.f32.mxu0 0.0
    %1626 = vmatmul.mubr.f32.gmra.mrb[0].mxu0 %v1559
    %v1627 = vpop.f32.mrb[0].mxu0
    %v1628 = vadd.f32 %v1557, %v1627
    %v1629 = vpop.f32.mrb[0].mxu0
    %1630 = vdwg.mxu0
    %v1631 = vadd.f32 %v1547, 1e-10
    %v1632 = vmul.f32 %v1631, 0.1
    %v1633 = vmul.f32 %v1628, 0.9
    %1635 = vset.pattern.permute.xlu0 0
    %1636 = vperm.xlu0 %1635, %v1632
    %v1637 = vpop.permute.xlu0 %1636
    %v1639 = vadd.f32 %v1637, %v1633
    %v1640 = vlog2.pop %v1639
    %v1641 = vmul.f32 %v1640, 0.6931472
    %vm1642 = vcmask 9216
    %1643 = vst.msk [vmem:[#allocation6] sm:$0x3] %vm1642, %v1641
    // Predicated region
    $region22: #{bert_ggcn_forward.1} parent=1 // pred_check
      _
    $region23: #{bert_ggcn_forward.1} parent=1 // pred_check_branch
      %1645 = sbr.rel (0) target = $region25
    $region24: #{bert_ggcn_forward.1} parent=1 // pred_region
      %s1647 = ssub.s32 32, 32
      %1648 = vsyncadd [#allocation5], %s1647
      %s1650 = sshll.u32 [#allocation6], 4
      %s1651 = int_to_ptr.vmem [resolvable:$true] %s1650
      %1653 = dma.vmem_to_hbm [thread:$0]  %s1651, 32, %s4, [#allocation5]
    $region25: #{bert_ggcn_forward.1} parent=1 // pred_fallthru
      _
    // Predicated region
    $region26: #{bert_ggcn_forward.1} parent=1 // pred_check
      _
    $region27: #{bert_ggcn_forward.1} parent=1 // pred_check_branch
      %1655 = sbr.rel (0) target = $region29
    $region28: #{bert_ggcn_forward.1} parent=1 // pred_region
      %1656 = dma.done [#allocation5], 32
    $region29: #{bert_ggcn_forward.1} parent=1 // pred_fallthru
      _
    %1657 = vsyncpa [#allocation4], 1
    %1658 = vsyncpa [#allocation5], 1

</llo_original>
